<compile_context>
chip_gen: v7x
topology: tpu7x:2x2x1
jax: 0.10.0
libtpu: 0.0.40
codegen_flags: <defaults>
</compile_context>

<pallas_src>
import functools

import jax
import jax.numpy as jnp
from jax.experimental import pallas as pl
from jax.experimental.pallas import tpu as pltpu


# ----------------------------------------------------------------------------
# One-time host-side weight transforms (hoisted out of the per-call path).
# ----------------------------------------------------------------------------
def _banded_conv_weight(w3, W):
    """(KH, KW, Ci, Co) conv weight -> (KH, W*Ci, W*Co) banded matrices.

    For each kernel row kh the matrix implements the kw-convolution along W
    with zero padding: band[wi*Ci+c, wo*Co+o] = w3[kh, kw, c, o] where
    wi = wo + (kw - KW//2); out-of-range taps are simply omitted.
    """
    KH, KW, Ci, Co = w3.shape
    mats = []
    for kh in range(KH):
        m = jnp.zeros((W * Ci, W * Co), jnp.float32)
        for kw in range(KW):
            off = kw - (KW // 2)
            sel = jnp.eye(W, k=-off, dtype=jnp.float32)   # sel[wi, wo]=1 iff wi=wo+off
            m = m + jnp.einsum("pq,co->pcqo", sel,
                               w3[kh, kw].astype(jnp.float32)).reshape(W * Ci, W * Co)
        mats.append(m)
    return jnp.stack(mats)


def _blockdiag_1x1_weight(w2, W):
    """(Ci, Co) 1x1-conv weight -> (W*Ci, W*Co) block-diagonal matrix."""
    Ci, Co = w2.shape
    return jnp.einsum("pq,co->pcqo", jnp.eye(W, dtype=jnp.float32),
                      w2.astype(jnp.float32)).reshape(W * Ci, W * Co)


def prepare_hg_block_params(params, H, W):
    """One-time transform of HG_Block params into kernel operands (cache this)."""
    bf16, f32 = jnp.bfloat16, jnp.float32
    layer_num = len(params["layers"])
    cin = params["layers"][0]["w"].shape[-2]
    mid = params["layers"][0]["w"].shape[-1]
    cout = params["agg"]["w"].shape[-1]

    wbands, biases = [], []
    for lp in params["layers"]:
        # Fold the (eval-mode) BN scale into the conv weight columns; the bias
        # stays as an f32 row add after accumulation.
        w_eff = lp["w"].astype(f32) * lp["scale"].astype(f32)
        wbands.append(_banded_conv_weight(w_eff, W).astype(bf16))   # (3, W*ci, W*mid)
        biases.append(jnp.tile(lp["bias"].reshape(1, mid).astype(f32), (1, W)))
    bias_layers = jnp.stack(biases)                                 # (L, 1, W*mid)

    agg = params["agg"]
    agg_w_eff = agg["w"].astype(f32) * agg["scale"].astype(f32)[None, :]
    splits = [cin] + [mid] * layer_num
    chunks, off = [], 0
    for sz in splits:
        chunks.append(agg_w_eff[off:off + sz])
        off += sz
    # Kernel concat order is [y1, ..., yL, x] so every W*mid chunk is
    # 128-lane aligned; stack the block-diagonal weights in the same order.
    ordered = chunks[1:] + [chunks[0]]
    agg_w = jnp.concatenate([_blockdiag_1x1_weight(c, W) for c in ordered],
                            axis=0).astype(bf16)                    # (W*total, W*cout)
    agg_b = jnp.tile(agg["bias"].reshape(1, cout).astype(f32), (1, W))

    ese = params["ese"]
    # Fold the HxW mean and the (w, c) lane layout into the ESE weight.
    ese_w = (jnp.tile(ese["w"].astype(f32), (W, 1)) / float(H * W)).astype(bf16)
    ese_b = ese["b"].reshape(1, cout).astype(f32)

    return {"wbands": tuple(wbands), "bias_layers": bias_layers,
            "agg_w": agg_w, "agg_b": agg_b, "ese_w": ese_w, "ese_b": ese_b}


# ----------------------------------------------------------------------------
# Fused HG_Block kernel (NB images fused into the matmul M per grid step).
# ----------------------------------------------------------------------------
def _make_hg_block_kernel(layer_num, NB, H, W, cin, mid, cout):
    M = NB * H
    f32, bf16 = jnp.float32, jnp.bfloat16

    def kernel(*refs):
        x_ref = refs[0]
        wband_refs = refs[1:1 + layer_num]
        bias_l_ref = refs[1 + layer_num]
        aggw_ref = refs[2 + layer_num]
        aggb_ref = refs[3 + layer_num]
        esew_ref = refs[4 + layer_num]
        eseb_ref = refs[5 + layer_num]
        o_ref = refs[6 + layer_num]

        # Batch fused into M: (NB, H, W*cin) -> (NB*H, W*cin), bf16.
        x = jnp.concatenate([x_ref[b] for b in range(NB)], axis=0)

        if NB > 1:
            h_in_img = jax.lax.broadcasted_iota(jnp.int32, (M, 1), 0) % H
            not_top = (h_in_img != 0)
            not_bot = (h_in_img != (H - 1))

        def shift_up(v):
            # row h <- v[h-1]; within-image top row becomes zero (conv padding).
            z = jnp.zeros((1, v.shape[1]), v.dtype)
            s = jnp.concatenate([z, v[:-1, :]], axis=0)
            if NB > 1:
                s = s * not_top.astype(s.dtype)
            return s

        def shift_dn(v):
            # row h <- v[h+1]; within-image bottom row becomes zero.
            z = jnp.zeros((1, v.shape[1]), v.dtype)
            s = jnp.concatenate([v[1:, :], z], axis=0)
            if NB > 1:
                s = s * not_bot.astype(s.dtype)
            return s

        # 3x3 conv + folded-BN + ReLU, as 3 bf16 tap matmuls per layer.
        feats = []
        cur = x
        for li in range(layer_num):
            w_ref = wband_refs[li]
            acc = jnp.dot(cur, w_ref[1], preferred_element_type=f32)           # kh=1
            acc = acc + jnp.dot(shift_up(cur), w_ref[0], preferred_element_type=f32)
            acc = acc + jnp.dot(shift_dn(cur), w_ref[2], preferred_element_type=f32)
            cur = jnp.maximum(acc + bias_l_ref[li], 0.0).astype(bf16)          # (M, W*mid)
            feats.append(cur)
        feats.append(x)    # x last -> every concat chunk starts on a 128-lane boundary

        # Single 1x1 aggregation matmul over the lane concat (implicit channel cat).
        cat = jnp.concatenate(feats, axis=1)                     # (M, W*total) bf16
        agg = jnp.dot(cat, aggw_ref[...], preferred_element_type=f32)
        agg = jnp.maximum(agg + aggb_ref[...], 0.0)              # (M, W*cout) f32

        # ESE per image: global mean -> 1x1 conv (+bias) -> sigmoid -> gate.
        for b in range(NB):
            blk = agg[b * H:(b + 1) * H, :]                      # (H, W*cout)
            colsum = jnp.sum(blk, axis=0, keepdims=True)         # (1, W*cout)
            att = jax.nn.sigmoid(
                jnp.dot(colsum.astype(bf16), esew_ref[...],
                        preferred_element_type=f32) + eseb_ref[...])   # (1, cout)
            gate = jnp.tile(att, (1, W))                         # (1, W*cout) lane layout
            o_ref[b] = (blk * gate).astype(o_ref.dtype)          # lane-dense store

    return kernel


@functools.partial(jax.jit, static_argnames=("num_blocks", "residual"))
def hg_block_forward_nchw(x_nchw, prep, num_blocks=None, residual=False):
    N, cin, H, W = x_nchw.shape
    layer_num = len(prep["wbands"])
    mid = prep["bias_layers"].shape[-1] // W
    cout = prep["agg_b"].shape[-1] // W

    if num_blocks is None:
        # Default keeps a 2-way parallel grid axis (v7x has 2 TensorCores);
        # pass num_blocks=1 on single-TC chips (v5e/v6e) to fuse the whole
        # batch into the matmul M dimension.
        num_blocks = 2 if (N >= 2 and N % 2 == 0) else 1
    assert N % num_blocks == 0
    NB = N // num_blocks

    x = jnp.transpose(x_nchw, (0, 2, 3, 1))                      # NCHW -> NHWC
    x_rows = x.astype(jnp.bfloat16).reshape(N, H, W * cin)       # lane-dense rows

    def _full(arr):
        nd = arr.ndim
        # NOTE: pipeline_mode=pl.Buffered(1) would halve the weight VMEM
        # footprint (constant index_map); negligible at these sizes, omitted.
        return pl.BlockSpec(arr.shape, lambda n: (0,) * nd)

    operands = [x_rows, *prep["wbands"], prep["bias_layers"],
                prep["agg_w"], prep["agg_b"], prep["ese_w"], prep["ese_b"]]
    in_specs = [pl.BlockSpec((NB, H, W * cin), lambda n: (n, 0, 0))]
    in_specs += [_full(a) for a in operands[1:]]

    kernel = _make_hg_block_kernel(layer_num, NB, H, W, cin, mid, cout)
    out = pl.pallas_call(
        kernel,
        # f32 output kept for residual-add precision; bf16 would halve writeback.
        out_shape=jax.ShapeDtypeStruct((N, H, W * cout), jnp.float32),
        grid=(num_blocks,),
        in_specs=in_specs,
        out_specs=pl.BlockSpec((NB, H, W * cout), lambda n: (n, 0, 0)),
        compiler_params=pltpu.CompilerParams(
            dimension_semantics=("parallel",)),
    )(*operands)

    y = jnp.transpose(out.reshape(N, H, W, cout), (0, 3, 1, 2))  # NHWC -> NCHW
    if residual:
        # TODO(synk): drop_path is Dropout(p) in torch; identity here (p=0.0).
        y = y + x_nchw
    return y


# ----------------------------------------------------------------------------
# Parameter construction (deterministic, synthetic). Eval-mode BatchNorm is
# folded into per-channel scale/bias: s = g/sqrt(v+eps), b = beta - mean*s.
# ----------------------------------------------------------------------------
def _fold_bn(key, c, eps=1e-5):
    k1, k2, k3, k4 = jax.random.split(key, 4)
    gamma = 1.0 + 0.1 * jax.random.normal(k1, (c,), jnp.float32)
    beta = 0.1 * jax.random.normal(k2, (c,), jnp.float32)
    mean = 0.1 * jax.random.normal(k3, (c,), jnp.float32)
    var = jnp.abs(1.0 + 0.1 * jax.random.normal(k4, (c,), jnp.float32))
    scale = gamma * jax.lax.rsqrt(var + eps)
    bias = beta - mean * scale
    return scale, bias


def make_hg_block_params(key, in_chs, mid_chs, out_chs, layer_num):
    params = {"layers": []}
    for i in range(layer_num):
        key, kw, kb = jax.random.split(key, 3)
        cin = in_chs if i == 0 else mid_chs
        w = 0.1 * jax.random.normal(kw, (3, 3, cin, mid_chs), jnp.float32)
        scale, bias = _fold_bn(kb, mid_chs)
        params["layers"].append({"w": w, "scale": scale, "bias": bias})

    total_chs = in_chs + layer_num * mid_chs
    key, kw, kb = jax.random.split(key, 3)
    agg_w = 0.1 * jax.random.normal(kw, (total_chs, out_chs), jnp.float32)
    agg_s, agg_b = _fold_bn(kb, out_chs)
    params["agg"] = {"w": agg_w, "scale": agg_s, "bias": agg_b}

    key, kw, kb = jax.random.split(key, 3)
    ese_w = 0.1 * jax.random.normal(kw, (out_chs, out_chs), jnp.float32)
    ese_b = 0.1 * jax.random.normal(kb, (out_chs,), jnp.float32)
    params["ese"] = {"w": ese_w, "b": ese_b}
    return params


# ----------------------------------------------------------------------------
# Pure-JAX reference (same bf16-matmul / f32-accumulate / scale-fold numerics).
# ----------------------------------------------------------------------------
def _ref_forward_nhwc(x, params):
    bf16, f32 = jnp.bfloat16, jnp.float32
    feats = [x]
    h = x
    for lp in params["layers"]:
        w_eff = (lp["w"].astype(f32) * lp["scale"]).astype(bf16)
        y = jax.lax.conv_general_dilated(
            h.astype(bf16), w_eff, window_strides=(1, 1), padding="SAME",
            dimension_numbers=("NHWC", "HWIO", "NHWC"),
            preferred_element_type=f32)
        h = jnp.maximum(y + lp["bias"], 0.0)
        feats.append(h)
    cat = jnp.concatenate([f.astype(bf16) for f in feats], axis=-1)
    agg = params["agg"]
    agg_w_eff = (agg["w"].astype(f32) * agg["scale"][None, :]).astype(bf16)
    a = jnp.einsum("nhwc,cd->nhwd", cat, agg_w_eff, preferred_element_type=f32)
    a = jnp.maximum(a + agg["bias"], 0.0)
    ese = params["ese"]
    m = a.mean(axis=(1, 2), keepdims=True)
    att = jax.nn.sigmoid(jnp.einsum("nhwc,cd->nhwd", m, ese["w"]) + ese["b"])
    return a * att


if __name__ == "__main__":
    N, IN_CHS, H, W = 2, 4, 16, 16
    MID_CHS, OUT_CHS, LAYER_NUM = 8, 16, 2

    key = jax.random.PRNGKey(0)
    kx, kp = jax.random.split(key)
    x_nchw = jax.random.normal(kx, (N, IN_CHS, H, W), jnp.float32)
    params = make_hg_block_params(kp, IN_CHS, MID_CHS, OUT_CHS, LAYER_NUM)

    # One-time weight encoding (hoisted out of the per-call / jit path).
    prep = prepare_hg_block_params(params, H, W)
    prep = jax.block_until_ready(prep)

    # Pure-JAX reference.
    x_nhwc = jnp.transpose(x_nchw, (0, 2, 3, 1))
    y_ref = jnp.transpose(_ref_forward_nhwc(x_nhwc, params), (0, 3, 1, 2))

    # v7x-style: two parallel grid blocks (one per TensorCore).
    y_p2 = jax.block_until_ready(hg_block_forward_nchw(x_nchw, prep, num_blocks=2))
    # v5e/v6e-style: single grid step, whole batch fused into the matmul M.
    y_p1 = jax.block_until_ready(hg_block_forward_nchw(x_nchw, prep, num_blocks=1))

    assert y_p2.shape == (N, OUT_CHS, H, W), y_p2.shape
    assert y_p1.shape == (N, OUT_CHS, H, W), y_p1.shape
    for y in (y_p2, y_p1):
        max_err = float(jnp.max(jnp.abs(y - y_ref)))
        assert jnp.allclose(y, y_ref, rtol=1e-2, atol=1e-2), max_err

    print("KERNEL_OK")
</pallas_src>

<mosaic_0001>
module attributes {stable_mosaic.version = 11 : i64} {
  func.func @kernel(%arg0: i32, %arg1: memref<1x16x64xbf16, #tpu.memory_space<vmem>>, %arg2: memref<3x64x128xbf16, #tpu.memory_space<vmem>>, %arg3: memref<3x128x128xbf16, #tpu.memory_space<vmem>>, %arg4: memref<2x1x128xf32, #tpu.memory_space<vmem>>, %arg5: memref<320x256xbf16, #tpu.memory_space<vmem>>, %arg6: memref<1x256xf32, #tpu.memory_space<vmem>>, %arg7: memref<256x16xbf16, #tpu.memory_space<vmem>>, %arg8: memref<1x16xf32, #tpu.memory_space<vmem>>, %arg9: memref<1x16x256xf32, #tpu.memory_space<vmem>>) attributes {dimension_semantics = [#tpu.dimension_semantics<parallel>], iteration_bounds = array<i64: 2>, scalar_prefetch = 0 : i64, scratch_operands = 0 : i64, tpu.core_type = #tpu.core_type<tc>, window_params = [{transform_indices = @transform_0, window_bounds = array<i64: 1, 16, 64>}, {pipeline_mode = #tpu.pipeline_mode<synchronous>, transform_indices = @transform_1, window_bounds = array<i64: 3, 64, 128>}, {pipeline_mode = #tpu.pipeline_mode<synchronous>, transform_indices = @transform_2, window_bounds = array<i64: 3, 128, 128>}, {pipeline_mode = #tpu.pipeline_mode<synchronous>, transform_indices = @transform_3, window_bounds = array<i64: 2, 1, 128>}, {pipeline_mode = #tpu.pipeline_mode<synchronous>, transform_indices = @transform_4, window_bounds = array<i64: 320, 256>}, {pipeline_mode = #tpu.pipeline_mode<synchronous>, transform_indices = @transform_5, window_bounds = array<i64: 1, 256>}, {pipeline_mode = #tpu.pipeline_mode<synchronous>, transform_indices = @transform_6, window_bounds = array<i64: 256, 16>}, {pipeline_mode = #tpu.pipeline_mode<synchronous>, transform_indices = @transform_7, window_bounds = array<i64: 1, 16>}, {transform_indices = @transform_8, window_bounds = array<i64: 1, 16, 256>}]} {
    %c0 = arith.constant 0 : index
    %c0_0 = arith.constant 0 : index
    %c0_1 = arith.constant 0 : index
    %0 = vector.load %arg1[%c0, %c0_0, %c0_1] : memref<1x16x64xbf16, #tpu.memory_space<vmem>>, vector<1x16x64xbf16>
    %1 = vector.shape_cast %0 : vector<1x16x64xbf16> to vector<16x64xbf16>
    %c1 = arith.constant 1 : index
    %c0_2 = arith.constant 0 : index
    %c0_3 = arith.constant 0 : index
    %2 = vector.load %arg2[%c1, %c0_2, %c0_3] : memref<3x64x128xbf16, #tpu.memory_space<vmem>>, vector<1x64x128xbf16>
    %3 = vector.shape_cast %2 : vector<1x64x128xbf16> to vector<64x128xbf16>
    %cst = arith.constant dense<0.000000e+00> : vector<16x128xf32>
    %4 = tpu.matmul %1, %3, %cst {dimension_numbers = #tpu.dot_dimension_numbers<[1], [0], [0], [1], [0, 0, 1, 1], [], []>} : vector<16x64xbf16>, vector<64x128xbf16>, vector<16x128xf32> -> vector<16x128xf32>
    %cst_4 = arith.constant 0.000000e+00 : bf16
    %5 = vector.broadcast %cst_4 : bf16 to vector<1x64xbf16>
    %6 = vector.extract_strided_slice %1 {offsets = [0, 0], sizes = [15, 64], strides = [1, 1]} : vector<16x64xbf16> to vector<15x64xbf16>
    %7 = tpu.concatenate %5, %6 in 0 : vector<1x64xbf16>, vector<15x64xbf16> -> vector<16x64xbf16>
    %c0_5 = arith.constant 0 : index
    %c0_6 = arith.constant 0 : index
    %c0_7 = arith.constant 0 : index
    %8 = vector.load %arg2[%c0_5, %c0_6, %c0_7] : memref<3x64x128xbf16, #tpu.memory_space<vmem>>, vector<1x64x128xbf16>
    %9 = vector.shape_cast %8 : vector<1x64x128xbf16> to vector<64x128xbf16>
    %cst_8 = arith.constant dense<0.000000e+00> : vector<16x128xf32>
    %10 = tpu.matmul %7, %9, %cst_8 {dimension_numbers = #tpu.dot_dimension_numbers<[1], [0], [0], [1], [0, 0, 1, 1], [], []>} : vector<16x64xbf16>, vector<64x128xbf16>, vector<16x128xf32> -> vector<16x128xf32>
    %11 = arith.addf %4, %10 : vector<16x128xf32>
    %cst_9 = arith.constant 0.000000e+00 : bf16
    %12 = vector.broadcast %cst_9 : bf16 to vector<1x64xbf16>
    %13 = vector.extract_strided_slice %1 {offsets = [1, 0], sizes = [15, 64], strides = [1, 1]} : vector<16x64xbf16> to vector<15x64xbf16>
    %14 = tpu.concatenate %13, %12 in 0 : vector<15x64xbf16>, vector<1x64xbf16> -> vector<16x64xbf16>
    %c2 = arith.constant 2 : index
    %c0_10 = arith.constant 0 : index
    %c0_11 = arith.constant 0 : index
    %15 = vector.load %arg2[%c2, %c0_10, %c0_11] : memref<3x64x128xbf16, #tpu.memory_space<vmem>>, vector<1x64x128xbf16>
    %16 = vector.shape_cast %15 : vector<1x64x128xbf16> to vector<64x128xbf16>
    %cst_12 = arith.constant dense<0.000000e+00> : vector<16x128xf32>
    %17 = tpu.matmul %14, %16, %cst_12 {dimension_numbers = #tpu.dot_dimension_numbers<[1], [0], [0], [1], [0, 0, 1, 1], [], []>} : vector<16x64xbf16>, vector<64x128xbf16>, vector<16x128xf32> -> vector<16x128xf32>
    %18 = arith.addf %11, %17 : vector<16x128xf32>
    %c0_13 = arith.constant 0 : index
    %c0_14 = arith.constant 0 : index
    %c0_15 = arith.constant 0 : index
    %19 = vector.load %arg4[%c0_13, %c0_14, %c0_15] : memref<2x1x128xf32, #tpu.memory_space<vmem>>, vector<1x1x128xf32>
    %20 = vector.shape_cast %19 : vector<1x1x128xf32> to vector<1x128xf32>
    %21 = vector.broadcast %20 : vector<1x128xf32> to vector<16x128xf32>
    %22 = arith.addf %18, %21 : vector<16x128xf32>
    %cst_16 = arith.constant 0.000000e+00 : f32
    %23 = vector.broadcast %cst_16 : f32 to vector<16x128xf32>
    %24 = arith.maximumf %22, %23 : vector<16x128xf32>
    %25 = arith.truncf %24 : vector<16x128xf32> to vector<16x128xbf16>
    %c1_17 = arith.constant 1 : index
    %c0_18 = arith.constant 0 : index
    %c0_19 = arith.constant 0 : index
    %26 = vector.load %arg3[%c1_17, %c0_18, %c0_19] : memref<3x128x128xbf16, #tpu.memory_space<vmem>>, vector<1x128x128xbf16>
    %27 = vector.shape_cast %26 : vector<1x128x128xbf16> to vector<128x128xbf16>
    %cst_20 = arith.constant dense<0.000000e+00> : vector<16x128xf32>
    %28 = tpu.matmul %25, %27, %cst_20 {dimension_numbers = #tpu.dot_dimension_numbers<[1], [0], [0], [1], [0, 0, 1, 1], [], []>} : vector<16x128xbf16>, vector<128x128xbf16>, vector<16x128xf32> -> vector<16x128xf32>
    %cst_21 = arith.constant 0.000000e+00 : bf16
    %29 = vector.broadcast %cst_21 : bf16 to vector<1x128xbf16>
    %30 = vector.extract_strided_slice %25 {offsets = [0, 0], sizes = [15, 128], strides = [1, 1]} : vector<16x128xbf16> to vector<15x128xbf16>
    %31 = tpu.concatenate %29, %30 in 0 : vector<1x128xbf16>, vector<15x128xbf16> -> vector<16x128xbf16>
    %c0_22 = arith.constant 0 : index
    %c0_23 = arith.constant 0 : index
    %c0_24 = arith.constant 0 : index
    %32 = vector.load %arg3[%c0_22, %c0_23, %c0_24] : memref<3x128x128xbf16, #tpu.memory_space<vmem>>, vector<1x128x128xbf16>
    %33 = vector.shape_cast %32 : vector<1x128x128xbf16> to vector<128x128xbf16>
    %cst_25 = arith.constant dense<0.000000e+00> : vector<16x128xf32>
    %34 = tpu.matmul %31, %33, %cst_25 {dimension_numbers = #tpu.dot_dimension_numbers<[1], [0], [0], [1], [0, 0, 1, 1], [], []>} : vector<16x128xbf16>, vector<128x128xbf16>, vector<16x128xf32> -> vector<16x128xf32>
    %35 = arith.addf %28, %34 : vector<16x128xf32>
    %cst_26 = arith.constant 0.000000e+00 : bf16
    %36 = vector.broadcast %cst_26 : bf16 to vector<1x128xbf16>
    %37 = vector.extract_strided_slice %25 {offsets = [1, 0], sizes = [15, 128], strides = [1, 1]} : vector<16x128xbf16> to vector<15x128xbf16>
    %38 = tpu.concatenate %37, %36 in 0 : vector<15x128xbf16>, vector<1x128xbf16> -> vector<16x128xbf16>
    %c2_27 = arith.constant 2 : index
    %c0_28 = arith.constant 0 : index
    %c0_29 = arith.constant 0 : index
    %39 = vector.load %arg3[%c2_27, %c0_28, %c0_29] : memref<3x128x128xbf16, #tpu.memory_space<vmem>>, vector<1x128x128xbf16>
    %40 = vector.shape_cast %39 : vector<1x128x128xbf16> to vector<128x128xbf16>
    %cst_30 = arith.constant dense<0.000000e+00> : vector<16x128xf32>
    %41 = tpu.matmul %38, %40, %cst_30 {dimension_numbers = #tpu.dot_dimension_numbers<[1], [0], [0], [1], [0, 0, 1, 1], [], []>} : vector<16x128xbf16>, vector<128x128xbf16>, vector<16x128xf32> -> vector<16x128xf32>
    %42 = arith.addf %35, %41 : vector<16x128xf32>
    %c1_31 = arith.constant 1 : index
    %c0_32 = arith.constant 0 : index
    %c0_33 = arith.constant 0 : index
    %43 = vector.load %arg4[%c1_31, %c0_32, %c0_33] : memref<2x1x128xf32, #tpu.memory_space<vmem>>, vector<1x1x128xf32>
    %44 = vector.shape_cast %43 : vector<1x1x128xf32> to vector<1x128xf32>
    %45 = vector.broadcast %44 : vector<1x128xf32> to vector<16x128xf32>
    %46 = arith.addf %42, %45 : vector<16x128xf32>
    %cst_34 = arith.constant 0.000000e+00 : f32
    %47 = vector.broadcast %cst_34 : f32 to vector<16x128xf32>
    %48 = arith.maximumf %46, %47 : vector<16x128xf32>
    %49 = arith.truncf %48 : vector<16x128xf32> to vector<16x128xbf16>
    %50 = tpu.concatenate %25, %49, %1 in 1 : vector<16x128xbf16>, vector<16x128xbf16>, vector<16x64xbf16> -> vector<16x320xbf16>
    %c0_35 = arith.constant 0 : index
    %c0_36 = arith.constant 0 : index
    %51 = vector.load %arg5[%c0_35, %c0_36] : memref<320x256xbf16, #tpu.memory_space<vmem>>, vector<320x256xbf16>
    %cst_37 = arith.constant dense<0.000000e+00> : vector<16x256xf32>
    %52 = tpu.matmul %50, %51, %cst_37 {dimension_numbers = #tpu.dot_dimension_numbers<[1], [0], [0], [1], [0, 0, 1, 1], [], []>} : vector<16x320xbf16>, vector<320x256xbf16>, vector<16x256xf32> -> vector<16x256xf32>
    %c0_38 = arith.constant 0 : index
    %c0_39 = arith.constant 0 : index
    %53 = vector.load %arg6[%c0_38, %c0_39] : memref<1x256xf32, #tpu.memory_space<vmem>>, vector<1x256xf32>
    %54 = vector.broadcast %53 : vector<1x256xf32> to vector<16x256xf32>
    %55 = arith.addf %52, %54 : vector<16x256xf32>
    %cst_40 = arith.constant 0.000000e+00 : f32
    %56 = vector.broadcast %cst_40 : f32 to vector<16x256xf32>
    %57 = arith.maximumf %55, %56 : vector<16x256xf32>
    %cst_41 = arith.constant dense<0.000000e+00> : vector<256xf32>
    %58 = vector.multi_reduction <add>, %57, %cst_41 [0] : vector<16x256xf32> to vector<256xf32>
    %59 = vector.shape_cast %58 : vector<256xf32> to vector<1x256xf32>
    %60 = arith.truncf %59 : vector<1x256xf32> to vector<1x256xbf16>
    %c0_42 = arith.constant 0 : index
    %c0_43 = arith.constant 0 : index
    %61 = vector.load %arg7[%c0_42, %c0_43] : memref<256x16xbf16, #tpu.memory_space<vmem>>, vector<256x16xbf16>
    %cst_44 = arith.constant dense<0.000000e+00> : vector<1x16xf32>
    %62 = tpu.matmul %60, %61, %cst_44 {dimension_numbers = #tpu.dot_dimension_numbers<[1], [0], [0], [1], [0, 0, 1, 1], [], []>} : vector<1x256xbf16>, vector<256x16xbf16>, vector<1x16xf32> -> vector<1x16xf32>
    %c0_45 = arith.constant 0 : index
    %c0_46 = arith.constant 0 : index
    %63 = vector.load %arg8[%c0_45, %c0_46] : memref<1x16xf32, #tpu.memory_space<vmem>>, vector<1x16xf32>
    %64 = arith.addf %62, %63 : vector<1x16xf32>
    %65 = arith.negf %64 : vector<1x16xf32>
    %66 = math.exp %65 : vector<1x16xf32>
    %cst_47 = arith.constant 1.000000e+00 : f32
    %67 = vector.broadcast %cst_47 : f32 to vector<1x16xf32>
    %68 = arith.addf %67, %66 : vector<1x16xf32>
    %69 = arith.divf %67, %68 : vector<1x16xf32>
    %70 = tpu.concatenate %69, %69, %69, %69, %69, %69, %69, %69, %69, %69, %69, %69, %69, %69, %69, %69 in 1 : vector<1x16xf32>, vector<1x16xf32>, vector<1x16xf32>, vector<1x16xf32>, vector<1x16xf32>, vector<1x16xf32>, vector<1x16xf32>, vector<1x16xf32>, vector<1x16xf32>, vector<1x16xf32>, vector<1x16xf32>, vector<1x16xf32>, vector<1x16xf32>, vector<1x16xf32>, vector<1x16xf32>, vector<1x16xf32> -> vector<1x256xf32>
    %71 = vector.broadcast %70 : vector<1x256xf32> to vector<16x256xf32>
    %72 = arith.mulf %57, %71 : vector<16x256xf32>
    %c0_48 = arith.constant 0 : index
    %c0_49 = arith.constant 0 : index
    %c0_50 = arith.constant 0 : index
    %73 = vector.load %arg9[%c0_48, %c0_49, %c0_50] : memref<1x16x256xf32, #tpu.memory_space<vmem>>, vector<1x16x256xf32>
    %74 = vector.shape_cast %73 : vector<1x16x256xf32> to vector<16x256xf32>
    %75 = vector.shape_cast %72 : vector<16x256xf32> to vector<1x16x256xf32>
    tpu.vector_store %arg9[%c0_48, %c0_49, %c0_50], %75 {strides = array<i32>} : memref<1x16x256xf32, #tpu.memory_space<vmem>>, vector<1x16x256xf32>,
    return
  }
  func.func @transform_0(%arg0: i32) -> (i32, i32, i32) {
    %c0_i32 = arith.constant 0 : i32
    %c0_i32_0 = arith.constant 0 : i32
    %c0_i32_1 = arith.constant 0 : i32
    return %arg0, %c0_i32, %c0_i32_0 : i32, i32, i32
  }
  func.func @transform_1(%arg0: i32) -> (i32, i32, i32) {
    %c0_i32 = arith.constant 0 : i32
    %c0_i32_0 = arith.constant 0 : i32
    %c0_i32_1 = arith.constant 0 : i32
    %c0_i32_2 = arith.constant 0 : i32
    return %c0_i32, %c0_i32_0, %c0_i32_1 : i32, i32, i32
  }
  func.func @transform_2(%arg0: i32) -> (i32, i32, i32) {
    %c0_i32 = arith.constant 0 : i32
    %c0_i32_0 = arith.constant 0 : i32
    %c0_i32_1 = arith.constant 0 : i32
    %c0_i32_2 = arith.constant 0 : i32
    return %c0_i32, %c0_i32_0, %c0_i32_1 : i32, i32, i32
  }
  func.func @transform_3(%arg0: i32) -> (i32, i32, i32) {
    %c0_i32 = arith.constant 0 : i32
    %c0_i32_0 = arith.constant 0 : i32
    %c0_i32_1 = arith.constant 0 : i32
    %c0_i32_2 = arith.constant 0 : i32
    return %c0_i32, %c0_i32_0, %c0_i32_1 : i32, i32, i32
  }
  func.func @transform_4(%arg0: i32) -> (i32, i32) {
    %c0_i32 = arith.constant 0 : i32
    %c0_i32_0 = arith.constant 0 : i32
    %c0_i32_1 = arith.constant 0 : i32
    return %c0_i32, %c0_i32_0 : i32, i32
  }
  func.func @transform_5(%arg0: i32) -> (i32, i32) {
    %c0_i32 = arith.constant 0 : i32
    %c0_i32_0 = arith.constant 0 : i32
    %c0_i32_1 = arith.constant 0 : i32
    return %c0_i32, %c0_i32_0 : i32, i32
  }
  func.func @transform_6(%arg0: i32) -> (i32, i32) {
    %c0_i32 = arith.constant 0 : i32
    %c0_i32_0 = arith.constant 0 : i32
    %c0_i32_1 = arith.constant 0 : i32
    return %c0_i32, %c0_i32_0 : i32, i32
  }
  func.func @transform_7(%arg0: i32) -> (i32, i32) {
    %c0_i32 = arith.constant 0 : i32
    %c0_i32_0 = arith.constant 0 : i32
    %c0_i32_1 = arith.constant 0 : i32
    return %c0_i32, %c0_i32_0 : i32, i32
  }
  func.func @transform_8(%arg0: i32) -> (i32, i32, i32) {
    %c0_i32 = arith.constant 0 : i32
    %c0_i32_0 = arith.constant 0 : i32
    %c0_i32_1 = arith.constant 0 : i32
    return %arg0, %c0_i32, %c0_i32_0 : i32, i32, i32
  }
}

</mosaic_0001>

<llo_original>
// kernel: hg_block_forward_nchw.1
$region0: #{hg_block_forward_nchw.1}
  #allocation0 [shape = 'u32[]', space=smem, size = 0x4, offset = 0x4, fixed_abs, tag = 'smem constant byte address 0x4 - core index']
  #allocation1 [shape = 'u32[144,128]{1,0:T(1,128)}', space=vmem, size = 0x12000, scoped, tag = 'internal scratch']
  %s0 = inlined_call_operand.vmem [shape: bf16[2,16,64], index: 0, kind: input, shape index: {}]
  %s1 = inlined_call_operand.hbm [shape: bf16[3,64,128], index: 1, kind: input, shape index: {}]
  %s2 = inlined_call_operand.vmem [shape: bf16[3,128,128], index: 2, kind: input, shape index: {}]
  %s3 = inlined_call_operand.vmem [shape: f32[2,1,128], index: 3, kind: input, shape index: {}]
  %s4 = inlined_call_operand.vmem [shape: bf16[320,256], index: 4, kind: input, shape index: {}]
  %s5 = inlined_call_operand.vmem [shape: f32[1,256], index: 5, kind: input, shape index: {}]
  %s6 = inlined_call_operand.vmem [shape: bf16[256,16], index: 6, kind: input, shape index: {}]
  %s7 = inlined_call_operand.vmem [shape: f32[1,16], index: 7, kind: input, shape index: {}]
  %s8 = inlined_call_operand.vmem [shape: f32[2,16,256], index: 8, kind: output, shape index: {}]
  %s9 = sld [smem:[#allocation0]]
  $region69: #{hg_block_forward_nchw.1} parent=0
    _
  %s11 = ssub.s32 1, %s9
  %s12 = scalar_select 0, %s11, %s9
  $region1: #{hg_block_forward_nchw.1} parent=0
    #allocation2 [shape = 'u8[49152]{0}', space=vmem, size = 0xc000, scoped, tag = 'input window, operand 1, single buffered']
    #allocation3 [shape = 's32[2]{0}', space=sflag, size = 0x8, scoped, tag = 'scoped memory for hg_block_forward_nchw.1']
    %13 = vsyncpa [#allocation3], 0
    loop: start=0, step=1, limit=4
    $region2: #{hg_block_forward_nchw.1} parent=1 // loop_pre_header
      _
    $region3: #{hg_block_forward_nchw.1} parent=1 // loop_header
      %s15 = sphi 0, %s19
      %p16 = scmp.ge.s32.totalorder %s15, 4
      %s25 = sphi 0, %s27
      %s28 = sphi 0, %s25
      %s29 = sphi 0, %s28
      %s45 = sphi 0, %s29
      %s49 = sphi 0, %s49
      %s51 = sphi 0, %s49
      %s52 = sphi 0, %s51
      %s66 = sphi 0, %s52
      %s70 = sphi 0, %s70
      %s72 = sphi 0, %s70
      %s73 = sphi 0, %s72
      %s87 = sphi 0, %s73
      %s91 = sphi 0, %s91
      %s93 = sphi 0, %s91
      %s94 = sphi 0, %s93
      %s108 = sphi 0, %s94
      %s112 = sphi 0, %s112
      %s114 = sphi 0, %s112
      %s115 = sphi 0, %s114
      %s129 = sphi 0, %s115
      %s133 = sphi 0, %s133
      %s135 = sphi 0, %s133
      %s136 = sphi 0, %s135
      %s150 = sphi 0, %s136
      %s154 = sphi 0, %s154
      %s156 = sphi 0, %s154
      %s157 = sphi 0, %s156
      %s171 = sphi 0, %s157
      %s175 = sphi 0, %s175
      %s177 = sphi 0, %s175
      %s178 = sphi 0, %s177
      %s192 = sphi 0, %s178
      %s198 = sphi 0, %s200
      %s201 = sphi 0, %s198
      %s202 = sphi 0, %s201
      %s218 = sphi 0, %s202
    $region4: #{hg_block_forward_nchw.1} parent=1 // loop_header_branch
      %18 = sbr.rel (%p16) target = $region8
    $region5: #{hg_block_forward_nchw.1} parent=1 // loop_body
      %s20 = ssub.s32 %s15, 1
      %s21 = ssub.s32 %s15, 2
      %s22 = sadd.s32 %s15, 1
      %s23 = ssub.s32 %s15, %s22
      %p24 = scmp.eq.s32.totalorder %s23, 0
      %s26 = sadd.s32 %s25, 1
      %s27 = scalar_select %p24, %s25, %s26
      %p30 = pneg %p24
      %p31 = scmp.eq.s32.totalorder %s15, 1
      %p32 = por %p30, %p31
      %p33 = scmp.ne.s32.totalorder %s25, %s28
      %p34 = scmp.eq.s32.totalorder %s15, 0
      %p35 = por %p33, %p34
      %p36 = scmp.ne.s32.totalorder %s25, %s28
      %p37 = scmp.eq.s32.totalorder %s20, 1
      %p38 = por %p36, %p37
      %p39 = scmp.ne.s32.totalorder %s28, %s29
      %p40 = scmp.eq.s32.totalorder %s20, 0
      %p41 = por %p39, %p40
      %p42 = scmp.ne.s32.totalorder %s28, %s29
      %p43 = scmp.eq.s32.totalorder %s21, 1
      %p44 = por %p42, %p43
      %p46 = scmp.ne.s32.totalorder %s29, %s45
      %p47 = scmp.eq.s32.totalorder %s21, 0
      %p48 = por %p46, %p47
      %s50 = sadd.s32 %s49, 1
      %p53 = scmp.eq.s32.totalorder %s15, 1
      %p54 = scmp.ne.s32.totalorder %s49, %s51
      %p55 = scmp.eq.s32.totalorder %s15, 0
      %p56 = por %p54, %p55
      %p57 = scmp.ne.s32.totalorder %s49, %s51
      %p58 = scmp.eq.s32.totalorder %s20, 1
      %p59 = por %p57, %p58
      %p60 = scmp.ne.s32.totalorder %s51, %s52
      %p61 = scmp.eq.s32.totalorder %s20, 0
      %p62 = por %p60, %p61
      %p63 = scmp.ne.s32.totalorder %s51, %s52
      %p64 = scmp.eq.s32.totalorder %s21, 1
      %p65 = por %p63, %p64
      %p67 = scmp.ne.s32.totalorder %s52, %s66
      %p68 = scmp.eq.s32.totalorder %s21, 0
      %p69 = por %p67, %p68
      %s71 = sadd.s32 %s70, 1
      %p74 = scmp.eq.s32.totalorder %s15, 1
      %p75 = scmp.ne.s32.totalorder %s70, %s72
      %p76 = scmp.eq.s32.totalorder %s15, 0
      %p77 = por %p75, %p76
      %p78 = scmp.ne.s32.totalorder %s70, %s72
      %p79 = scmp.eq.s32.totalorder %s20, 1
      %p80 = por %p78, %p79
      %p81 = scmp.ne.s32.totalorder %s72, %s73
      %p82 = scmp.eq.s32.totalorder %s20, 0
      %p83 = por %p81, %p82
      %p84 = scmp.ne.s32.totalorder %s72, %s73
      %p85 = scmp.eq.s32.totalorder %s21, 1
      %p86 = por %p84, %p85
      %p88 = scmp.ne.s32.totalorder %s73, %s87
      %p89 = scmp.eq.s32.totalorder %s21, 0
      %p90 = por %p88, %p89
      %s92 = sadd.s32 %s91, 1
      %p95 = scmp.eq.s32.totalorder %s15, 1
      %p96 = scmp.ne.s32.totalorder %s91, %s93
      %p97 = scmp.eq.s32.totalorder %s15, 0
      %p98 = por %p96, %p97
      %p99 = scmp.ne.s32.totalorder %s91, %s93
      %p100 = scmp.eq.s32.totalorder %s20, 1
      %p101 = por %p99, %p100
      %p102 = scmp.ne.s32.totalorder %s93, %s94
      %p103 = scmp.eq.s32.totalorder %s20, 0
      %p104 = por %p102, %p103
      %p105 = scmp.ne.s32.totalorder %s93, %s94
      %p106 = scmp.eq.s32.totalorder %s21, 1
      %p107 = por %p105, %p106
      %p109 = scmp.ne.s32.totalorder %s94, %s108
      %p110 = scmp.eq.s32.totalorder %s21, 0
      %p111 = por %p109, %p110
      %s113 = sadd.s32 %s112, 1
      %p116 = scmp.eq.s32.totalorder %s15, 1
      %p117 = scmp.ne.s32.totalorder %s112, %s114
      %p118 = scmp.eq.s32.totalorder %s15, 0
      %p119 = por %p117, %p118
      %p120 = scmp.ne.s32.totalorder %s112, %s114
      %p121 = scmp.eq.s32.totalorder %s20, 1
      %p122 = por %p120, %p121
      %p123 = scmp.ne.s32.totalorder %s114, %s115
      %p124 = scmp.eq.s32.totalorder %s20, 0
      %p125 = por %p123, %p124
      %p126 = scmp.ne.s32.totalorder %s114, %s115
      %p127 = scmp.eq.s32.totalorder %s21, 1
      %p128 = por %p126, %p127
      %p130 = scmp.ne.s32.totalorder %s115, %s129
      %p131 = scmp.eq.s32.totalorder %s21, 0
      %p132 = por %p130, %p131
      %s134 = sadd.s32 %s133, 1
      %p137 = scmp.eq.s32.totalorder %s15, 1
      %p138 = scmp.ne.s32.totalorder %s133, %s135
      %p139 = scmp.eq.s32.totalorder %s15, 0
      %p140 = por %p138, %p139
      %p141 = scmp.ne.s32.totalorder %s133, %s135
      %p142 = scmp.eq.s32.totalorder %s20, 1
      %p143 = por %p141, %p142
      %p144 = scmp.ne.s32.totalorder %s135, %s136
      %p145 = scmp.eq.s32.totalorder %s20, 0
      %p146 = por %p144, %p145
      %p147 = scmp.ne.s32.totalorder %s135, %s136
      %p148 = scmp.eq.s32.totalorder %s21, 1
      %p149 = por %p147, %p148
      %p151 = scmp.ne.s32.totalorder %s136, %s150
      %p152 = scmp.eq.s32.totalorder %s21, 0
      %p153 = por %p151, %p152
      %s155 = sadd.s32 %s154, 1
      %p158 = scmp.eq.s32.totalorder %s15, 1
      %p159 = scmp.ne.s32.totalorder %s154, %s156
      %p160 = scmp.eq.s32.totalorder %s15, 0
      %p161 = por %p159, %p160
      %p162 = scmp.ne.s32.totalorder %s154, %s156
      %p163 = scmp.eq.s32.totalorder %s20, 1
      %p164 = por %p162, %p163
      %p165 = scmp.ne.s32.totalorder %s156, %s157
      %p166 = scmp.eq.s32.totalorder %s20, 0
      %p167 = por %p165, %p166
      %p168 = scmp.ne.s32.totalorder %s156, %s157
      %p169 = scmp.eq.s32.totalorder %s21, 1
      %p170 = por %p168, %p169
      %p172 = scmp.ne.s32.totalorder %s157, %s171
      %p173 = scmp.eq.s32.totalorder %s21, 0
      %p174 = por %p172, %p173
      %s176 = sadd.s32 %s175, 1
      %p179 = scmp.eq.s32.totalorder %s15, 1
      %p180 = scmp.ne.s32.totalorder %s175, %s177
      %p181 = scmp.eq.s32.totalorder %s15, 0
      %p182 = por %p180, %p181
      %p183 = scmp.ne.s32.totalorder %s175, %s177
      %p184 = scmp.eq.s32.totalorder %s20, 1
      %p185 = por %p183, %p184
      %p186 = scmp.ne.s32.totalorder %s177, %s178
      %p187 = scmp.eq.s32.totalorder %s20, 0
      %p188 = por %p186, %p187
      %p189 = scmp.ne.s32.totalorder %s177, %s178
      %p190 = scmp.eq.s32.totalorder %s21, 1
      %p191 = por %p189, %p190
      %p193 = scmp.ne.s32.totalorder %s178, %s192
      %p194 = scmp.eq.s32.totalorder %s21, 0
      %p195 = por %p193, %p194
      %s196 = ssub.s32 %s15, %s22
      %p197 = scmp.eq.s32.totalorder %s196, 0
      %s199 = sadd.s32 %s198, 1
      %s200 = scalar_select %p197, %s198, %s199
      %p203 = pneg %p197
      %p204 = scmp.eq.s32.totalorder %s15, 1
      %p205 = por %p203, %p204
      %p206 = scmp.ne.s32.totalorder %s198, %s201
      %p207 = scmp.eq.s32.totalorder %s15, 0
      %p208 = por %p206, %p207
      %p209 = scmp.ne.s32.totalorder %s198, %s201
      %p210 = scmp.eq.s32.totalorder %s20, 1
      %p211 = por %p209, %p210
      %p212 = scmp.ne.s32.totalorder %s201, %s202
      %p213 = scmp.eq.s32.totalorder %s20, 0
      %p214 = por %p212, %p213
      %p215 = scmp.ne.s32.totalorder %s201, %s202
      %p216 = scmp.eq.s32.totalorder %s21, 1
      %p217 = por %p215, %p216
      %p219 = scmp.ne.s32.totalorder %s202, %s218
      %p220 = scmp.eq.s32.totalorder %s21, 0
      %p221 = por %p219, %p220
      %p222 = scmp.le.s32.totalorder 1, %s15
      %p223 = scmp.lt.s32.totalorder %s15, 3
      %p224 = pnand %p222, %p223
      %p225 = pneg %p224
      // Predicated region
      $region9: #{hg_block_forward_nchw.1} parent=5 // pred_check
        _
      $region10: #{hg_block_forward_nchw.1} parent=5 // pred_check_branch
        %227 = sbr.rel (%p224) target = $region12
      $region11: #{hg_block_forward_nchw.1} parent=5 // pred_region
        %s228 = ssub.s32 %s15, 1
        // Predicated region
        $region13: #{hg_block_forward_nchw.1} parent=11 // pred_check
          %p229 = pneg %p62
        $region14: #{hg_block_forward_nchw.1} parent=11 // pred_check_branch
          %231 = sbr.rel (%p229) target = $region16
        $region15: #{hg_block_forward_nchw.1} parent=11 // pred_region
          %s233 = ssub.s32 1536, 1536
          %234 = vsyncadd [#allocation3], %s233
          %s235 = sshll.u32 [#allocation2], 4
          %s236 = int_to_ptr.vmem [resolvable:$true] %s235
          %241 = dma.hbm_to_vmem [thread:$0]  %s1, 1536, %s236, [#allocation3], 64, 64, 4
        $region16: #{hg_block_forward_nchw.1} parent=11 // pred_fallthru
          _
        // Predicated region
        $region17: #{hg_block_forward_nchw.1} parent=11 // pred_check
          %p242 = pneg %p83
        $region18: #{hg_block_forward_nchw.1} parent=11 // pred_check_branch
          %244 = sbr.rel (%p242) target = $region20
        $region19: #{hg_block_forward_nchw.1} parent=11 // pred_region
          _
        $region20: #{hg_block_forward_nchw.1} parent=11 // pred_fallthru
          _
        // Predicated region
        $region21: #{hg_block_forward_nchw.1} parent=11 // pred_check
          %p245 = pneg %p104
        $region22: #{hg_block_forward_nchw.1} parent=11 // pred_check_branch
          %247 = sbr.rel (%p245) target = $region24
        $region23: #{hg_block_forward_nchw.1} parent=11 // pred_region
          _
        $region24: #{hg_block_forward_nchw.1} parent=11 // pred_fallthru
          _
        // Predicated region
        $region25: #{hg_block_forward_nchw.1} parent=11 // pred_check
          %p248 = pneg %p125
        $region26: #{hg_block_forward_nchw.1} parent=11 // pred_check_branch
          %250 = sbr.rel (%p248) target = $region28
        $region27: #{hg_block_forward_nchw.1} parent=11 // pred_region
          _
        $region28: #{hg_block_forward_nchw.1} parent=11 // pred_fallthru
          _
        // Predicated region
        $region29: #{hg_block_forward_nchw.1} parent=11 // pred_check
          %p251 = pneg %p146
        $region30: #{hg_block_forward_nchw.1} parent=11 // pred_check_branch
          %253 = sbr.rel (%p251) target = $region32
        $region31: #{hg_block_forward_nchw.1} parent=11 // pred_region
          _
        $region32: #{hg_block_forward_nchw.1} parent=11 // pred_fallthru
          _
        // Predicated region
        $region33: #{hg_block_forward_nchw.1} parent=11 // pred_check
          %p254 = pneg %p167
        $region34: #{hg_block_forward_nchw.1} parent=11 // pred_check_branch
          %256 = sbr.rel (%p254) target = $region36
        $region35: #{hg_block_forward_nchw.1} parent=11 // pred_region
          _
        $region36: #{hg_block_forward_nchw.1} parent=11 // pred_fallthru
          _
        // Predicated region
        $region37: #{hg_block_forward_nchw.1} parent=11 // pred_check
          %p257 = pneg %p188
        $region38: #{hg_block_forward_nchw.1} parent=11 // pred_check_branch
          %259 = sbr.rel (%p257) target = $region40
        $region39: #{hg_block_forward_nchw.1} parent=11 // pred_region
          _
        $region40: #{hg_block_forward_nchw.1} parent=11 // pred_fallthru
          _
      $region12: #{hg_block_forward_nchw.1} parent=5 // pred_fallthru
        _
      %p260 = scmp.lt.s32.totalorder %s15, 2
      // Predicated region
      $region41: #{hg_block_forward_nchw.1} parent=5 // pred_check
        %p261 = pneg %p260
      $region42: #{hg_block_forward_nchw.1} parent=5 // pred_check_branch
        %263 = sbr.rel (%p261) target = $region44
      $region43: #{hg_block_forward_nchw.1} parent=5 // pred_region
        // Predicated region
        $region45: #{hg_block_forward_nchw.1} parent=43 // pred_check
          %p264 = pneg %p35
        $region46: #{hg_block_forward_nchw.1} parent=43 // pred_check_branch
          %266 = sbr.rel (%p264) target = $region48
        $region47: #{hg_block_forward_nchw.1} parent=43 // pred_region
          %p267 = scmp.lt.s32.totalorder %s15, 1
          %s268 = scalar_select %p267, %s15, 1
          %s269 = smul.addr %s268, 2
          %s270 = smul.addr %s269, 4
          %s271 = scalar_lea.vmem %s0, %s270
        $region48: #{hg_block_forward_nchw.1} parent=43 // pred_fallthru
          _
      $region44: #{hg_block_forward_nchw.1} parent=5 // pred_fallthru
        _
      %p272 = scmp.le.s32.totalorder 1, %s15
      %p273 = scmp.lt.s32.totalorder %s15, 3
      %p274 = pnand %p272, %p273
      %p275 = pneg %p274
      // Predicated region
      $region49: #{hg_block_forward_nchw.1} parent=5 // pred_check
        _
      $region50: #{hg_block_forward_nchw.1} parent=5 // pred_check_branch
        %277 = sbr.rel (%p274) target = $region52
      $region51: #{hg_block_forward_nchw.1} parent=5 // pred_region
        %s278 = ssub.s32 %s15, 1
        // Predicated region
        $region53: #{hg_block_forward_nchw.1} parent=51 // pred_check
          %p279 = pneg %p62
        $region54: #{hg_block_forward_nchw.1} parent=51 // pred_check_branch
          %281 = sbr.rel (%p279) target = $region56
        $region55: #{hg_block_forward_nchw.1} parent=51 // pred_region
          %282 = dma.done [#allocation3], 1536
        $region56: #{hg_block_forward_nchw.1} parent=51 // pred_fallthru
          _
        %p283 = scmp.lt.s32.totalorder %s20, 1
        %s284 = scalar_select %p283, %s20, 1
        %s285 = smul.addr %s284, 2
        %s286 = smul.addr %s285, 4
        %s287 = scalar_lea.vmem %s0, %s286
        %p288 = pneg %p41
        %p289 = pneg %p38
        %p290 = pneg %p62
        %p291 = pneg %p59
        %p292 = pneg %p83
        %p293 = pneg %p80
        %p294 = pneg %p104
        %p295 = pneg %p101
        %p296 = pneg %p125
        %p297 = pneg %p122
        %p298 = pneg %p146
        %p299 = pneg %p143
        %p300 = pneg %p167
        %p301 = pneg %p164
        %p302 = pneg %p188
        %p303 = pneg %p185
        %p304 = pneg %p214
        %p305 = pneg %p211
        %p306 = scmp.lt.s32.totalorder %s20, 1
        %s307 = scalar_select %p306, %s20, 1
        %s308 = smul.addr %s307, 4
        %s309 = smul.addr %s308, 8
        %s310 = scalar_lea.vmem %s8, %s309
        %p311 = scmp.lt.s32.totalorder %s20, 1
        %s312 = scalar_select %p311, %s20, 1
        %s313 = smul.addr %s312, 2
        %s314 = smul.addr %s313, 4
        %s315 = scalar_lea.vmem %s0, %s314
        %p316 = scmp.lt.s32.totalorder %s20, 1
        %s317 = scalar_select %p316, %s20, 1
        %s318 = smul.addr %s317, 4
        %s319 = smul.addr %s318, 8
        %s320 = scalar_lea.vmem %s8, %s319
        %v322 = vld [vmem:[%s315] sm:$0xf]
        %v323 = vld [vmem:[%s315 + $0x4] sm:$0xf]
        %s324 = scalar_lea.vmem [#allocation2], 32
        %v325 = vld [vmem:[%s324] sm:$0xf]
        %v326 = vld [vmem:[%s324 + $0x4] sm:$0xf]
        %v327 = vld [vmem:[%s324 + $0x8] sm:$0xf]
        %v328 = vld [vmem:[%s324 + $0xc] sm:$0xf]
        %v329 = vld [vmem:[%s324 + $0x10] sm:$0xf]
        %v330 = vld [vmem:[%s324 + $0x14] sm:$0xf]
        %v331 = vld [vmem:[%s324 + $0x18] sm:$0xf]
        %v332 = vld [vmem:[%s324 + $0x1c] sm:$0xf]
        %v335 = vunpack.c.l.b16 %v322
        %v336 = vunpack.c.l.b16 %v323
        %v337 = vpack.c.b16 %v336, %v335
        %v339 = vshrl.u32 %v337, 16
        %v341 = vrot.slane %v339, 7
        %v342 = vshll.u32 %v337, 16
        %v344 = vor.u32 %v341, %v342
        %vm346 = vcmask 1040384
        %vm347 = vsmask.f32 256
        %vm348 = vmand %vm346, %vm347
        %v349 = vsel %vm348, 0, %v344
        %v350 = vld [vmem:[#allocation2] sm:$0xf]
        %v351 = vld [vmem:[#allocation2 + $0x4] sm:$0xf]
        %v352 = vld [vmem:[#allocation2 + $0x8] sm:$0xf]
        %v353 = vld [vmem:[#allocation2 + $0xc] sm:$0xf]
        %v354 = vld [vmem:[#allocation2 + $0x10] sm:$0xf]
        %v355 = vld [vmem:[#allocation2 + $0x14] sm:$0xf]
        %v356 = vld [vmem:[#allocation2 + $0x18] sm:$0xf]
        %v357 = vld [vmem:[#allocation2 + $0x1c] sm:$0xf]
        %v366 = vunpack.c.l.b16 %v350
        %v367 = vunpack.c.l.b16 %v351
        %v368 = vunpack.c.l.b16 %v352
        %v369 = vunpack.c.l.b16 %v353
        %v370 = vunpack.c.l.b16 %v354
        %v371 = vunpack.c.l.b16 %v355
        %v372 = vunpack.c.l.b16 %v356
        %v373 = vunpack.c.l.b16 %v357
        %v374 = vpack.c.b16 %v367, %v366
        %v375 = vpack.c.b16 %v369, %v368
        %v376 = vpack.c.b16 %v371, %v370
        %v377 = vpack.c.b16 %v373, %v372
        %vm382 = vcmask 523264
        %v384 = vsel %vm382, %v349, 0
        %386 = vmatprep.subr.bf16.mxu0 0
        %387 = vmatpush1.bf16.msra.mxu0 %v374
        %388 = vmatprep.subr.bf16.mxu0 0
        %389 = vmatpush1.bf16.msra.mxu0 %v375
        %390 = vmatprep.subr.bf16.mxu0 0
        %391 = vmatpush1.bf16.msra.mxu0 %v376
        %392 = vmatprep.subr.bf16.mxu0 0
        %393 = vmatpush1.bf16.msra.mxu0 %v377
        %394 = vmatprep.subr.bf16.mxu0 0
        %395 = vmatpush1.bf16.msra.mxu0 0
        %396 = vmatprep.subr.bf16.mxu0 0
        %397 = vmatpush1.bf16.msra.mxu0 0
        %398 = vmatprep.subr.bf16.mxu0 0
        %399 = vmatpush1.bf16.msra.mxu0 0
        %400 = vmatprep.subr.bf16.mxu0 0
        %401 = vmatpush1.bf16.msra.mxu0 0
        %402 = vmatprep.subr.bf16.mxu0 0
        %403 = vmatpush1.bf16.msra.mxu0 0
        %404 = vmatprep.subr.bf16.mxu0 0
        %405 = vmatpush1.bf16.msra.mxu0 0
        %406 = vmatprep.subr.bf16.mxu0 0
        %407 = vmatpush1.bf16.msra.mxu0 0
        %408 = vmatprep.subr.bf16.mxu0 0
        %409 = vmatpush1.bf16.msra.mxu0 0
        %410 = vmatprep.subr.bf16.mxu0 0
        %411 = vmatpush1.bf16.msra.mxu0 0
        %412 = vmatprep.subr.bf16.mxu0 0
        %413 = vmatpush1.bf16.msra.mxu0 0
        %414 = vmatprep.subr.bf16.mxu0 0
        %415 = vmatpush1.bf16.msra.mxu0 0
        %416 = vmatprep.subr.bf16.mxu0 0
        %417 = vmatpush1.bf16.msra.mxu0 0
        %418 = vmatprep.mubr.bf16.mxu0 0
        %419 = vmatmul.mubr.bf16.gmra.mrb[0].mxu0 %v384
        %v420 = vpop.f32.mrb[0].mxu0
        %v421 = vadd.f32 0.0, %v420
        %v422 = vpop.f32.mrb[0].mxu0
        %v423 = vpop.f32.mrb[0].mxu0
        %v424 = vadd.f32 0.0, %v423
        %v425 = vpop.f32.mrb[0].mxu0
        %426 = vdwg.mxu0
        %v435 = vunpack.c.l.b16 %v325
        %v436 = vunpack.c.l.b16 %v326
        %v437 = vunpack.c.l.b16 %v327
        %v438 = vunpack.c.l.b16 %v328
        %v439 = vunpack.c.l.b16 %v329
        %v440 = vunpack.c.l.b16 %v330
        %v441 = vunpack.c.l.b16 %v331
        %v442 = vunpack.c.l.b16 %v332
        %v443 = vpack.c.b16 %v436, %v435
        %v444 = vpack.c.b16 %v438, %v437
        %v445 = vpack.c.b16 %v440, %v439
        %v446 = vpack.c.b16 %v442, %v441
        %v451 = vsel %vm382, %v337, 0
        %453 = vmatprep.subr.bf16.mxu0 0
        %454 = vmatpush1.bf16.msra.mxu0 %v443
        %455 = vmatprep.subr.bf16.mxu0 0
        %456 = vmatpush1.bf16.msra.mxu0 %v444
        %457 = vmatprep.subr.bf16.mxu0 0
        %458 = vmatpush1.bf16.msra.mxu0 %v445
        %459 = vmatprep.subr.bf16.mxu0 0
        %460 = vmatpush1.bf16.msra.mxu0 %v446
        %461 = vmatprep.subr.bf16.mxu0 0
        %462 = vmatpush1.bf16.msra.mxu0 0
        %463 = vmatprep.subr.bf16.mxu0 0
        %464 = vmatpush1.bf16.msra.mxu0 0
        %465 = vmatprep.subr.bf16.mxu0 0
        %466 = vmatpush1.bf16.msra.mxu0 0
        %467 = vmatprep.subr.bf16.mxu0 0
        %468 = vmatpush1.bf16.msra.mxu0 0
        %469 = vmatprep.subr.bf16.mxu0 0
        %470 = vmatpush1.bf16.msra.mxu0 0
        %471 = vmatprep.subr.bf16.mxu0 0
        %472 = vmatpush1.bf16.msra.mxu0 0
        %473 = vmatprep.subr.bf16.mxu0 0
        %474 = vmatpush1.bf16.msra.mxu0 0
        %475 = vmatprep.subr.bf16.mxu0 0
        %476 = vmatpush1.bf16.msra.mxu0 0
        %477 = vmatprep.subr.bf16.mxu0 0
        %478 = vmatpush1.bf16.msra.mxu0 0
        %479 = vmatprep.subr.bf16.mxu0 0
        %480 = vmatpush1.bf16.msra.mxu0 0
        %481 = vmatprep.subr.bf16.mxu0 0
        %482 = vmatpush1.bf16.msra.mxu0 0
        %483 = vmatprep.subr.bf16.mxu0 0
        %484 = vmatpush1.bf16.msra.mxu0 0
        %485 = vmatprep.mubr.bf16.mxu0 0
        %486 = vmatmul.mubr.bf16.gmra.mrb[0].mxu0 %v451
        %v487 = vpop.f32.mrb[0].mxu0
        %v488 = vadd.f32 %v421, %v487
        %v489 = vpop.f32.mrb[0].mxu0
        %v490 = vpop.f32.mrb[0].mxu0
        %v491 = vadd.f32 %v424, %v490
        %v492 = vpop.f32.mrb[0].mxu0
        %493 = vdwg.mxu0
        %v494 = vrot.slane %v342, 1
        %v495 = vor.u32 %v339, %v494
        %vm497 = vcmask 1047552
        %vm498 = vsmask.f32 7424
        %vm499 = vmand %vm497, %vm498
        %v500 = vsel %vm499, %v495, 0
        %s501 = scalar_lea.vmem [#allocation2], 64
        %v502 = vld [vmem:[%s501] sm:$0xf]
        %v503 = vld [vmem:[%s501 + $0x4] sm:$0xf]
        %v504 = vld [vmem:[%s501 + $0x8] sm:$0xf]
        %v505 = vld [vmem:[%s501 + $0xc] sm:$0xf]
        %v506 = vld [vmem:[%s501 + $0x10] sm:$0xf]
        %v507 = vld [vmem:[%s501 + $0x14] sm:$0xf]
        %v508 = vld [vmem:[%s501 + $0x18] sm:$0xf]
        %v509 = vld [vmem:[%s501 + $0x1c] sm:$0xf]
        %v518 = vunpack.c.l.b16 %v502
        %v519 = vunpack.c.l.b16 %v503
        %v520 = vunpack.c.l.b16 %v504
        %v521 = vunpack.c.l.b16 %v505
        %v522 = vunpack.c.l.b16 %v506
        %v523 = vunpack.c.l.b16 %v507
        %v524 = vunpack.c.l.b16 %v508
        %v525 = vunpack.c.l.b16 %v509
        %v526 = vpack.c.b16 %v519, %v518
        %v527 = vpack.c.b16 %v521, %v520
        %v528 = vpack.c.b16 %v523, %v522
        %v529 = vpack.c.b16 %v525, %v524
        %v535 = vsel %vm382, %v500, 0
        %537 = vmatprep.subr.bf16.mxu0 0
        %538 = vmatpush1.bf16.msra.mxu0 %v526
        %539 = vmatprep.subr.bf16.mxu0 0
        %540 = vmatpush1.bf16.msra.mxu0 %v527
        %541 = vmatprep.subr.bf16.mxu0 0
        %542 = vmatpush1.bf16.msra.mxu0 %v528
        %543 = vmatprep.subr.bf16.mxu0 0
        %544 = vmatpush1.bf16.msra.mxu0 %v529
        %545 = vmatprep.subr.bf16.mxu0 0
        %546 = vmatpush1.bf16.msra.mxu0 0
        %547 = vmatprep.subr.bf16.mxu0 0
        %548 = vmatpush1.bf16.msra.mxu0 0
        %549 = vmatprep.subr.bf16.mxu0 0
        %550 = vmatpush1.bf16.msra.mxu0 0
        %551 = vmatprep.subr.bf16.mxu0 0
        %552 = vmatpush1.bf16.msra.mxu0 0
        %553 = vmatprep.subr.bf16.mxu0 0
        %554 = vmatpush1.bf16.msra.mxu0 0
        %555 = vmatprep.subr.bf16.mxu0 0
        %556 = vmatpush1.bf16.msra.mxu0 0
        %557 = vmatprep.subr.bf16.mxu0 0
        %558 = vmatpush1.bf16.msra.mxu0 0
        %559 = vmatprep.subr.bf16.mxu0 0
        %560 = vmatpush1.bf16.msra.mxu0 0
        %561 = vmatprep.subr.bf16.mxu0 0
        %562 = vmatpush1.bf16.msra.mxu0 0
        %563 = vmatprep.subr.bf16.mxu0 0
        %564 = vmatpush1.bf16.msra.mxu0 0
        %565 = vmatprep.subr.bf16.mxu0 0
        %566 = vmatpush1.bf16.msra.mxu0 0
        %567 = vmatprep.subr.bf16.mxu0 0
        %568 = vmatpush1.bf16.msra.mxu0 0
        %569 = vmatprep.mubr.bf16.mxu0 0
        %570 = vmatmul.mubr.bf16.gmra.mrb[0].mxu0 %v535
        %v571 = vpop.f32.mrb[0].mxu0
        %v572 = vadd.f32 0.0, %v571
        %v573 = vpop.f32.mrb[0].mxu0
        %v574 = vpop.f32.mrb[0].mxu0
        %v575 = vadd.f32 0.0, %v574
        %v576 = vpop.f32.mrb[0].mxu0
        %577 = vdwg.mxu0
        %v578 = vadd.f32 %v488, %v572
        %v579 = vadd.f32 %v491, %v575
        %v580 = vld [vmem:[%s3] sm:$0x1]
        %v582 = vlaneseq
        %v583 = vshrl.u32 %v582, 7
        %v584 = vsub.s32 0, %v583
        %v585 = vrot.slane %v580, %v584
        %v587 = vadd.f32 %v578, %v585
        %v588 = vadd.f32 %v579, %v585
        %v589 = vmax.f32 %v587, 0.0
        %v590 = vmax.f32 %v588, 0.0
        %v591 = vpack.c.bf16 %v590, %v589
        %s592 = scalar_lea.vmem %s2, 64
        %v593 = vld [vmem:[%s592] sm:$0xf]
        %v594 = vld [vmem:[%s592 + $0x4] sm:$0xf]
        %v595 = vld [vmem:[%s592 + $0x8] sm:$0xf]
        %v596 = vld [vmem:[%s592 + $0xc] sm:$0xf]
        %v597 = vld [vmem:[%s592 + $0x10] sm:$0xf]
        %v598 = vld [vmem:[%s592 + $0x14] sm:$0xf]
        %v599 = vld [vmem:[%s592 + $0x18] sm:$0xf]
        %v600 = vld [vmem:[%s592 + $0x1c] sm:$0xf]
        %v601 = vld [vmem:[%s592 + $0x20] sm:$0xf]
        %v602 = vld [vmem:[%s592 + $0x24] sm:$0xf]
        %v603 = vld [vmem:[%s592 + $0x28] sm:$0xf]
        %v604 = vld [vmem:[%s592 + $0x2c] sm:$0xf]
        %v605 = vld [vmem:[%s592 + $0x30] sm:$0xf]
        %v606 = vld [vmem:[%s592 + $0x34] sm:$0xf]
        %v607 = vld [vmem:[%s592 + $0x38] sm:$0xf]
        %v608 = vld [vmem:[%s592 + $0x3c] sm:$0xf]
        %v610 = vshrl.u32 %v591, 16
        %v612 = vrot.slane %v610, 7
        %v613 = vshll.u32 %v591, 16
        %v615 = vor.u32 %v612, %v613
        %v617 = vsel %vm348, 0, %v615
        %v618 = vld [vmem:[%s2] sm:$0xf]
        %v619 = vld [vmem:[%s2 + $0x4] sm:$0xf]
        %v620 = vld [vmem:[%s2 + $0x8] sm:$0xf]
        %v621 = vld [vmem:[%s2 + $0xc] sm:$0xf]
        %v622 = vld [vmem:[%s2 + $0x10] sm:$0xf]
        %v623 = vld [vmem:[%s2 + $0x14] sm:$0xf]
        %v624 = vld [vmem:[%s2 + $0x18] sm:$0xf]
        %v625 = vld [vmem:[%s2 + $0x1c] sm:$0xf]
        %v626 = vld [vmem:[%s2 + $0x20] sm:$0xf]
        %v627 = vld [vmem:[%s2 + $0x24] sm:$0xf]
        %v628 = vld [vmem:[%s2 + $0x28] sm:$0xf]
        %v629 = vld [vmem:[%s2 + $0x2c] sm:$0xf]
        %v630 = vld [vmem:[%s2 + $0x30] sm:$0xf]
        %v631 = vld [vmem:[%s2 + $0x34] sm:$0xf]
        %v632 = vld [vmem:[%s2 + $0x38] sm:$0xf]
        %v633 = vld [vmem:[%s2 + $0x3c] sm:$0xf]
        %v650 = vunpack.c.l.b16 %v618
        %v651 = vunpack.c.l.b16 %v619
        %v652 = vunpack.c.l.b16 %v620
        %v653 = vunpack.c.l.b16 %v621
        %v654 = vunpack.c.l.b16 %v622
        %v655 = vunpack.c.l.b16 %v623
        %v656 = vunpack.c.l.b16 %v624
        %v657 = vunpack.c.l.b16 %v625
        %v658 = vunpack.c.l.b16 %v626
        %v659 = vunpack.c.l.b16 %v627
        %v660 = vunpack.c.l.b16 %v628
        %v661 = vunpack.c.l.b16 %v629
        %v662 = vunpack.c.l.b16 %v630
        %v663 = vunpack.c.l.b16 %v631
        %v664 = vunpack.c.l.b16 %v632
        %v665 = vunpack.c.l.b16 %v633
        %v666 = vpack.c.b16 %v651, %v650
        %v667 = vpack.c.b16 %v653, %v652
        %v668 = vpack.c.b16 %v655, %v654
        %v669 = vpack.c.b16 %v657, %v656
        %v670 = vpack.c.b16 %v659, %v658
        %v671 = vpack.c.b16 %v661, %v660
        %v672 = vpack.c.b16 %v663, %v662
        %v673 = vpack.c.b16 %v665, %v664
        %682 = vmatprep.subr.bf16.mxu0 0
        %683 = vmatpush1.bf16.msra.mxu0 %v666
        %684 = vmatprep.subr.bf16.mxu0 0
        %685 = vmatpush1.bf16.msra.mxu0 %v667
        %686 = vmatprep.subr.bf16.mxu0 0
        %687 = vmatpush1.bf16.msra.mxu0 %v668
        %688 = vmatprep.subr.bf16.mxu0 0
        %689 = vmatpush1.bf16.msra.mxu0 %v669
        %690 = vmatprep.subr.bf16.mxu0 0
        %691 = vmatpush1.bf16.msra.mxu0 %v670
        %692 = vmatprep.subr.bf16.mxu0 0
        %693 = vmatpush1.bf16.msra.mxu0 %v671
        %694 = vmatprep.subr.bf16.mxu0 0
        %695 = vmatpush1.bf16.msra.mxu0 %v672
        %696 = vmatprep.subr.bf16.mxu0 0
        %697 = vmatpush1.bf16.msra.mxu0 %v673
        %698 = vmatprep.subr.bf16.mxu0 0
        %699 = vmatpush1.bf16.msra.mxu0 0
        %700 = vmatprep.subr.bf16.mxu0 0
        %701 = vmatpush1.bf16.msra.mxu0 0
        %702 = vmatprep.subr.bf16.mxu0 0
        %703 = vmatpush1.bf16.msra.mxu0 0
        %704 = vmatprep.subr.bf16.mxu0 0
        %705 = vmatpush1.bf16.msra.mxu0 0
        %706 = vmatprep.subr.bf16.mxu0 0
        %707 = vmatpush1.bf16.msra.mxu0 0
        %708 = vmatprep.subr.bf16.mxu0 0
        %709 = vmatpush1.bf16.msra.mxu0 0
        %710 = vmatprep.subr.bf16.mxu0 0
        %711 = vmatpush1.bf16.msra.mxu0 0
        %712 = vmatprep.subr.bf16.mxu0 0
        %713 = vmatpush1.bf16.msra.mxu0 0
        %714 = vmatprep.mubr.bf16.mxu0 0
        %715 = vmatmul.mubr.bf16.gmra.mrb[0].mxu0 %v617
        %v716 = vpop.f32.mrb[0].mxu0
        %v717 = vadd.f32 0.0, %v716
        %v718 = vpop.f32.mrb[0].mxu0
        %v719 = vpop.f32.mrb[0].mxu0
        %v720 = vadd.f32 0.0, %v719
        %v721 = vpop.f32.mrb[0].mxu0
        %722 = vdwg.mxu0
        %v739 = vunpack.c.l.b16 %v593
        %v740 = vunpack.c.l.b16 %v594
        %v741 = vunpack.c.l.b16 %v595
        %v742 = vunpack.c.l.b16 %v596
        %v743 = vunpack.c.l.b16 %v597
        %v744 = vunpack.c.l.b16 %v598
        %v745 = vunpack.c.l.b16 %v599
        %v746 = vunpack.c.l.b16 %v600
        %v747 = vunpack.c.l.b16 %v601
        %v748 = vunpack.c.l.b16 %v602
        %v749 = vunpack.c.l.b16 %v603
        %v750 = vunpack.c.l.b16 %v604
        %v751 = vunpack.c.l.b16 %v605
        %v752 = vunpack.c.l.b16 %v606
        %v753 = vunpack.c.l.b16 %v607
        %v754 = vunpack.c.l.b16 %v608
        %v755 = vpack.c.b16 %v740, %v739
        %v756 = vpack.c.b16 %v742, %v741
        %v757 = vpack.c.b16 %v744, %v743
        %v758 = vpack.c.b16 %v746, %v745
        %v759 = vpack.c.b16 %v748, %v747
        %v760 = vpack.c.b16 %v750, %v749
        %v761 = vpack.c.b16 %v752, %v751
        %v762 = vpack.c.b16 %v754, %v753
        %771 = vmatprep.subr.bf16.mxu0 0
        %772 = vmatpush1.bf16.msra.mxu0 %v755
        %773 = vmatprep.subr.bf16.mxu0 0
        %774 = vmatpush1.bf16.msra.mxu0 %v756
        %775 = vmatprep.subr.bf16.mxu0 0
        %776 = vmatpush1.bf16.msra.mxu0 %v757
        %777 = vmatprep.subr.bf16.mxu0 0
        %778 = vmatpush1.bf16.msra.mxu0 %v758
        %779 = vmatprep.subr.bf16.mxu0 0
        %780 = vmatpush1.bf16.msra.mxu0 %v759
        %781 = vmatprep.subr.bf16.mxu0 0
        %782 = vmatpush1.bf16.msra.mxu0 %v760
        %783 = vmatprep.subr.bf16.mxu0 0
        %784 = vmatpush1.bf16.msra.mxu0 %v761
        %785 = vmatprep.subr.bf16.mxu0 0
        %786 = vmatpush1.bf16.msra.mxu0 %v762
        %787 = vmatprep.subr.bf16.mxu0 0
        %788 = vmatpush1.bf16.msra.mxu0 0
        %789 = vmatprep.subr.bf16.mxu0 0
        %790 = vmatpush1.bf16.msra.mxu0 0
        %791 = vmatprep.subr.bf16.mxu0 0
        %792 = vmatpush1.bf16.msra.mxu0 0
        %793 = vmatprep.subr.bf16.mxu0 0
        %794 = vmatpush1.bf16.msra.mxu0 0
        %795 = vmatprep.subr.bf16.mxu0 0
        %796 = vmatpush1.bf16.msra.mxu0 0
        %797 = vmatprep.subr.bf16.mxu0 0
        %798 = vmatpush1.bf16.msra.mxu0 0
        %799 = vmatprep.subr.bf16.mxu0 0
        %800 = vmatpush1.bf16.msra.mxu0 0
        %801 = vmatprep.subr.bf16.mxu0 0
        %802 = vmatpush1.bf16.msra.mxu0 0
        %803 = vmatprep.mubr.bf16.mxu0 0
        %804 = vmatmul.mubr.bf16.gmra.mrb[0].mxu0 %v591
        %v805 = vpop.f32.mrb[0].mxu0
        %v806 = vadd.f32 %v717, %v805
        %v807 = vpop.f32.mrb[0].mxu0
        %v808 = vpop.f32.mrb[0].mxu0
        %v809 = vadd.f32 %v720, %v808
        %v810 = vpop.f32.mrb[0].mxu0
        %811 = vdwg.mxu0
        %v812 = vrot.slane %v613, 1
        %v813 = vor.u32 %v610, %v812
        %v815 = vsel %vm499, %v813, 0
        %s816 = scalar_lea.vmem %s2, 128
        %v817 = vld [vmem:[%s816] sm:$0xf]
        %v818 = vld [vmem:[%s816 + $0x4] sm:$0xf]
        %v819 = vld [vmem:[%s816 + $0x8] sm:$0xf]
        %v820 = vld [vmem:[%s816 + $0xc] sm:$0xf]
        %v821 = vld [vmem:[%s816 + $0x10] sm:$0xf]
        %v822 = vld [vmem:[%s816 + $0x14] sm:$0xf]
        %v823 = vld [vmem:[%s816 + $0x18] sm:$0xf]
        %v824 = vld [vmem:[%s816 + $0x1c] sm:$0xf]
        %v825 = vld [vmem:[%s816 + $0x20] sm:$0xf]
        %v826 = vld [vmem:[%s816 + $0x24] sm:$0xf]
        %v827 = vld [vmem:[%s816 + $0x28] sm:$0xf]
        %v828 = vld [vmem:[%s816 + $0x2c] sm:$0xf]
        %v829 = vld [vmem:[%s816 + $0x30] sm:$0xf]
        %v830 = vld [vmem:[%s816 + $0x34] sm:$0xf]
        %v831 = vld [vmem:[%s816 + $0x38] sm:$0xf]
        %v832 = vld [vmem:[%s816 + $0x3c] sm:$0xf]
        %v849 = vunpack.c.l.b16 %v817
        %v850 = vunpack.c.l.b16 %v818
        %v851 = vunpack.c.l.b16 %v819
        %v852 = vunpack.c.l.b16 %v820
        %v853 = vunpack.c.l.b16 %v821
        %v854 = vunpack.c.l.b16 %v822
        %v855 = vunpack.c.l.b16 %v823
        %v856 = vunpack.c.l.b16 %v824
        %v857 = vunpack.c.l.b16 %v825
        %v858 = vunpack.c.l.b16 %v826
        %v859 = vunpack.c.l.b16 %v827
        %v860 = vunpack.c.l.b16 %v828
        %v861 = vunpack.c.l.b16 %v829
        %v862 = vunpack.c.l.b16 %v830
        %v863 = vunpack.c.l.b16 %v831
        %v864 = vunpack.c.l.b16 %v832
        %v865 = vpack.c.b16 %v850, %v849
        %v866 = vpack.c.b16 %v852, %v851
        %v867 = vpack.c.b16 %v854, %v853
        %v868 = vpack.c.b16 %v856, %v855
        %v869 = vpack.c.b16 %v858, %v857
        %v870 = vpack.c.b16 %v860, %v859
        %v871 = vpack.c.b16 %v862, %v861
        %v872 = vpack.c.b16 %v864, %v863
        %881 = vmatprep.subr.bf16.mxu0 0
        %882 = vmatpush1.bf16.msra.mxu0 %v865
        %883 = vmatprep.subr.bf16.mxu0 0
        %884 = vmatpush1.bf16.msra.mxu0 %v866
        %885 = vmatprep.subr.bf16.mxu0 0
        %886 = vmatpush1.bf16.msra.mxu0 %v867
        %887 = vmatprep.subr.bf16.mxu0 0
        %888 = vmatpush1.bf16.msra.mxu0 %v868
        %889 = vmatprep.subr.bf16.mxu0 0
        %890 = vmatpush1.bf16.msra.mxu0 %v869
        %891 = vmatprep.subr.bf16.mxu0 0
        %892 = vmatpush1.bf16.msra.mxu0 %v870
        %893 = vmatprep.subr.bf16.mxu0 0
        %894 = vmatpush1.bf16.msra.mxu0 %v871
        %895 = vmatprep.subr.bf16.mxu0 0
        %896 = vmatpush1.bf16.msra.mxu0 %v872
        %897 = vmatprep.subr.bf16.mxu0 0
        %898 = vmatpush1.bf16.msra.mxu0 0
        %899 = vmatprep.subr.bf16.mxu0 0
        %900 = vmatpush1.bf16.msra.mxu0 0
        %901 = vmatprep.subr.bf16.mxu0 0
        %902 = vmatpush1.bf16.msra.mxu0 0
        %903 = vmatprep.subr.bf16.mxu0 0
        %904 = vmatpush1.bf16.msra.mxu0 0
        %905 = vmatprep.subr.bf16.mxu0 0
        %906 = vmatpush1.bf16.msra.mxu0 0
        %907 = vmatprep.subr.bf16.mxu0 0
        %908 = vmatpush1.bf16.msra.mxu0 0
        %909 = vmatprep.subr.bf16.mxu0 0
        %910 = vmatpush1.bf16.msra.mxu0 0
        %911 = vmatprep.subr.bf16.mxu0 0
        %912 = vmatpush1.bf16.msra.mxu0 0
        %913 = vmatprep.mubr.bf16.mxu0 0
        %914 = vmatmul.mubr.bf16.gmra.mrb[0].mxu0 %v815
        %v915 = vpop.f32.mrb[0].mxu0
        %v916 = vadd.f32 0.0, %v915
        %v917 = vpop.f32.mrb[0].mxu0
        %v918 = vpop.f32.mrb[0].mxu0
        %v919 = vadd.f32 0.0, %v918
        %v920 = vpop.f32.mrb[0].mxu0
        %921 = vdwg.mxu0
        %v922 = vadd.f32 %v806, %v916
        %v923 = vadd.f32 %v809, %v919
        %s924 = scalar_lea.vmem %s3, 1
        %v925 = vld [vmem:[%s924] sm:$0x1]
        %v927 = vlaneseq
        %v928 = vshrl.u32 %v927, 7
        %v929 = vsub.s32 0, %v928
        %v930 = vrot.slane %v925, %v929
        %v932 = vadd.f32 %v922, %v930
        %v933 = vadd.f32 %v923, %v930
        %v934 = vmax.f32 %v932, 0.0
        %v935 = vmax.f32 %v933, 0.0
        %v936 = vpack.c.bf16 %v935, %v934
        %v937 = vld [vmem:[%s4] sm:$0xff]
        %v938 = vld [vmem:[%s4 + $0x8] sm:$0xff]
        %v939 = vld [vmem:[%s4 + $0x10] sm:$0xff]
        %v940 = vld [vmem:[%s4 + $0x18] sm:$0xff]
        %v941 = vld [vmem:[%s4 + $0x20] sm:$0xff]
        %v942 = vld [vmem:[%s4 + $0x28] sm:$0xff]
        %v943 = vld [vmem:[%s4 + $0x30] sm:$0xff]
        %v944 = vld [vmem:[%s4 + $0x38] sm:$0xff]
        %v945 = vld [vmem:[%s4 + $0x40] sm:$0xff]
        %v946 = vld [vmem:[%s4 + $0x48] sm:$0xff]
        %v947 = vld [vmem:[%s4 + $0x50] sm:$0xff]
        %v948 = vld [vmem:[%s4 + $0x58] sm:$0xff]
        %v949 = vld [vmem:[%s4 + $0x60] sm:$0xff]
        %v950 = vld [vmem:[%s4 + $0x68] sm:$0xff]
        %v951 = vld [vmem:[%s4 + $0x70] sm:$0xff]
        %v952 = vld [vmem:[%s4 + $0x78] sm:$0xff]
        %v953 = vld [vmem:[%s4 + $0x80] sm:$0xff]
        %v954 = vld [vmem:[%s4 + $0x88] sm:$0xff]
        %v955 = vld [vmem:[%s4 + $0x90] sm:$0xff]
        %v956 = vld [vmem:[%s4 + $0x98] sm:$0xff]
        %v957 = vld [vmem:[%s4 + $0xa0] sm:$0xff]
        %v958 = vld [vmem:[%s4 + $0xa8] sm:$0xff]
        %v959 = vld [vmem:[%s4 + $0xb0] sm:$0xff]
        %v960 = vld [vmem:[%s4 + $0xb8] sm:$0xff]
        %v961 = vld [vmem:[%s4 + $0xc0] sm:$0xff]
        %v962 = vld [vmem:[%s4 + $0xc8] sm:$0xff]
        %v963 = vld [vmem:[%s4 + $0xd0] sm:$0xff]
        %v964 = vld [vmem:[%s4 + $0xd8] sm:$0xff]
        %v965 = vld [vmem:[%s4 + $0xe0] sm:$0xff]
        %v966 = vld [vmem:[%s4 + $0xe8] sm:$0xff]
        %v967 = vld [vmem:[%s4 + $0xf0] sm:$0xff]
        %v968 = vld [vmem:[%s4 + $0xf8] sm:$0xff]
        %v969 = vld [vmem:[%s4 + $0x100] sm:$0xff]
        %v970 = vld [vmem:[%s4 + $0x108] sm:$0xff]
        %v971 = vld [vmem:[%s4 + $0x110] sm:$0xff]
        %v972 = vld [vmem:[%s4 + $0x118] sm:$0xff]
        %v973 = vld [vmem:[%s4 + $0x120] sm:$0xff]
        %v974 = vld [vmem:[%s4 + $0x128] sm:$0xff]
        %v975 = vld [vmem:[%s4 + $0x130] sm:$0xff]
        %v976 = vld [vmem:[%s4 + $0x138] sm:$0xff]
        %v977 = vld [vmem:[%s5] sm:$0x3]
        %v979 = vlaneseq
        %v980 = vshrl.u32 %v979, 7
        %v981 = vsub.s32 0, %v980
        %v982 = vrot.slane %v977, %v981
        %v983 = vlaneseq
        %v984 = vshrl.u32 %v983, 7
        %v985 = vsub.s32 1, %v984
        %v986 = vrot.slane %v977, %v985
        %v1029 = vunpack.c.l.b16 %v937
        %v1030 = vunpack.c.h.b16 %v937
        %v1031 = vunpack.c.l.b16 %v938
        %v1032 = vunpack.c.h.b16 %v938
        %v1033 = vunpack.c.l.b16 %v939
        %v1034 = vunpack.c.h.b16 %v939
        %v1035 = vunpack.c.l.b16 %v940
        %v1036 = vunpack.c.h.b16 %v940
        %v1037 = vunpack.c.l.b16 %v941
        %v1038 = vunpack.c.h.b16 %v941
        %v1039 = vunpack.c.l.b16 %v942
        %v1040 = vunpack.c.h.b16 %v942
        %v1041 = vunpack.c.l.b16 %v943
        %v1042 = vunpack.c.h.b16 %v943
        %v1043 = vunpack.c.l.b16 %v944
        %v1044 = vunpack.c.h.b16 %v944
        %v1045 = vunpack.c.l.b16 %v945
        %v1046 = vunpack.c.h.b16 %v945
        %v1047 = vunpack.c.l.b16 %v946
        %v1048 = vunpack.c.h.b16 %v946
        %v1049 = vunpack.c.l.b16 %v947
        %v1050 = vunpack.c.h.b16 %v947
        %v1051 = vunpack.c.l.b16 %v948
        %v1052 = vunpack.c.h.b16 %v948
        %v1053 = vunpack.c.l.b16 %v949
        %v1054 = vunpack.c.h.b16 %v949
        %v1055 = vunpack.c.l.b16 %v950
        %v1056 = vunpack.c.h.b16 %v950
        %v1057 = vunpack.c.l.b16 %v951
        %v1058 = vunpack.c.h.b16 %v951
        %v1059 = vunpack.c.l.b16 %v952
        %v1060 = vunpack.c.h.b16 %v952
        %v1061 = vunpack.c.l.b16 %v953
        %v1062 = vunpack.c.h.b16 %v953
        %v1063 = vunpack.c.l.b16 %v954
        %v1064 = vunpack.c.h.b16 %v954
        %v1065 = vunpack.c.l.b16 %v955
        %v1066 = vunpack.c.h.b16 %v955
        %v1067 = vunpack.c.l.b16 %v956
        %v1068 = vunpack.c.h.b16 %v956
        %v1069 = vunpack.c.l.b16 %v957
        %v1070 = vunpack.c.h.b16 %v957
        %v1071 = vunpack.c.l.b16 %v958
        %v1072 = vunpack.c.h.b16 %v958
        %v1073 = vunpack.c.l.b16 %v959
        %v1074 = vunpack.c.h.b16 %v959
        %v1075 = vunpack.c.l.b16 %v960
        %v1076 = vunpack.c.h.b16 %v960
        %v1077 = vunpack.c.l.b16 %v961
        %v1078 = vunpack.c.h.b16 %v961
        %v1079 = vunpack.c.l.b16 %v962
        %v1080 = vunpack.c.h.b16 %v962
        %v1081 = vunpack.c.l.b16 %v963
        %v1082 = vunpack.c.h.b16 %v963
        %v1083 = vunpack.c.l.b16 %v964
        %v1084 = vunpack.c.h.b16 %v964
        %v1085 = vunpack.c.l.b16 %v965
        %v1086 = vunpack.c.h.b16 %v965
        %v1087 = vunpack.c.l.b16 %v966
        %v1088 = vunpack.c.h.b16 %v966
        %v1089 = vunpack.c.l.b16 %v967
        %v1090 = vunpack.c.h.b16 %v967
        %v1091 = vunpack.c.l.b16 %v968
        %v1092 = vunpack.c.h.b16 %v968
        %v1093 = vunpack.c.l.b16 %v969
        %v1094 = vunpack.c.h.b16 %v969
        %v1095 = vunpack.c.l.b16 %v970
        %v1096 = vunpack.c.h.b16 %v970
        %v1097 = vunpack.c.l.b16 %v971
        %v1098 = vunpack.c.h.b16 %v971
        %v1099 = vunpack.c.l.b16 %v972
        %v1100 = vunpack.c.h.b16 %v972
        %v1101 = vunpack.c.l.b16 %v973
        %v1102 = vunpack.c.h.b16 %v973
        %v1103 = vunpack.c.l.b16 %v974
        %v1104 = vunpack.c.h.b16 %v974
        %v1105 = vunpack.c.l.b16 %v975
        %v1106 = vunpack.c.h.b16 %v975
        %v1107 = vunpack.c.l.b16 %v976
        %v1108 = vunpack.c.h.b16 %v976
        %v1109 = vpack.c.b16 %v1031, %v1029
        %v1110 = vpack.c.b16 %v1032, %v1030
        %v1111 = vpack.c.b16 %v1035, %v1033
        %v1112 = vpack.c.b16 %v1036, %v1034
        %v1113 = vpack.c.b16 %v1039, %v1037
        %v1114 = vpack.c.b16 %v1040, %v1038
        %v1115 = vpack.c.b16 %v1043, %v1041
        %v1116 = vpack.c.b16 %v1044, %v1042
        %v1117 = vpack.c.b16 %v1047, %v1045
        %v1118 = vpack.c.b16 %v1048, %v1046
        %v1119 = vpack.c.b16 %v1051, %v1049
        %v1120 = vpack.c.b16 %v1052, %v1050
        %v1121 = vpack.c.b16 %v1055, %v1053
        %v1122 = vpack.c.b16 %v1056, %v1054
        %v1123 = vpack.c.b16 %v1059, %v1057
        %v1124 = vpack.c.b16 %v1060, %v1058
        %v1125 = vpack.c.b16 %v1063, %v1061
        %v1126 = vpack.c.b16 %v1064, %v1062
        %v1127 = vpack.c.b16 %v1067, %v1065
        %v1128 = vpack.c.b16 %v1068, %v1066
        %v1129 = vpack.c.b16 %v1071, %v1069
        %v1130 = vpack.c.b16 %v1072, %v1070
        %v1131 = vpack.c.b16 %v1075, %v1073
        %v1132 = vpack.c.b16 %v1076, %v1074
        %v1133 = vpack.c.b16 %v1079, %v1077
        %v1134 = vpack.c.b16 %v1080, %v1078
        %v1135 = vpack.c.b16 %v1083, %v1081
        %v1136 = vpack.c.b16 %v1084, %v1082
        %v1137 = vpack.c.b16 %v1087, %v1085
        %v1138 = vpack.c.b16 %v1088, %v1086
        %v1139 = vpack.c.b16 %v1091, %v1089
        %v1140 = vpack.c.b16 %v1092, %v1090
        %v1141 = vpack.c.b16 %v1095, %v1093
        %v1142 = vpack.c.b16 %v1096, %v1094
        %v1143 = vpack.c.b16 %v1099, %v1097
        %v1144 = vpack.c.b16 %v1100, %v1098
        %v1145 = vpack.c.b16 %v1103, %v1101
        %v1146 = vpack.c.b16 %v1104, %v1102
        %v1147 = vpack.c.b16 %v1107, %v1105
        %v1148 = vpack.c.b16 %v1108, %v1106
        %1189 = vmatprep.subr.bf16.mxu0 %v1110
        %1190 = vmatpush1.bf16.msra.mxu0 %v1109
        %1191 = vmatprep.subr.bf16.mxu0 %v1112
        %1192 = vmatpush1.bf16.msra.mxu0 %v1111
        %1193 = vmatprep.subr.bf16.mxu0 %v1114
        %1194 = vmatpush1.bf16.msra.mxu0 %v1113
        %1195 = vmatprep.subr.bf16.mxu0 %v1116
        %1196 = vmatpush1.bf16.msra.mxu0 %v1115
        %1197 = vmatprep.subr.bf16.mxu0 %v1118
        %1198 = vmatpush1.bf16.msra.mxu0 %v1117
        %1199 = vmatprep.subr.bf16.mxu0 %v1120
        %1200 = vmatpush1.bf16.msra.mxu0 %v1119
        %1201 = vmatprep.subr.bf16.mxu0 %v1122
        %1202 = vmatpush1.bf16.msra.mxu0 %v1121
        %1203 = vmatprep.subr.bf16.mxu0 %v1124
        %1204 = vmatpush1.bf16.msra.mxu0 %v1123
        %1205 = vmatprep.subr.bf16.mxu0 %v1126
        %1206 = vmatpush1.bf16.msra.mxu0 %v1125
        %1207 = vmatprep.subr.bf16.mxu0 %v1128
        %1208 = vmatpush1.bf16.msra.mxu0 %v1127
        %1209 = vmatprep.subr.bf16.mxu0 %v1130
        %1210 = vmatpush1.bf16.msra.mxu0 %v1129
        %1211 = vmatprep.subr.bf16.mxu0 %v1132
        %1212 = vmatpush1.bf16.msra.mxu0 %v1131
        %1213 = vmatprep.subr.bf16.mxu0 %v1134
        %1214 = vmatpush1.bf16.msra.mxu0 %v1133
        %1215 = vmatprep.subr.bf16.mxu0 %v1136
        %1216 = vmatpush1.bf16.msra.mxu0 %v1135
        %1217 = vmatprep.subr.bf16.mxu0 %v1138
        %1218 = vmatpush1.bf16.msra.mxu0 %v1137
        %1219 = vmatprep.subr.bf16.mxu0 %v1140
        %1220 = vmatpush1.bf16.msra.mxu0 %v1139
        %1221 = vmatprep.mubr.bf16.mxu0 %v936
        %1222 = vmatmul.mubr.bf16.gmra.mrb[0].mxu0 %v591
        %v1223 = vpop.f32.mrb[0].mxu0
        %v1224 = vadd.f32 %v982, %v1223
        %v1225 = vpop.f32.mrb[0].mxu0
        %v1226 = vadd.f32 %v986, %v1225
        %v1227 = vpop.f32.mrb[0].mxu0
        %v1228 = vadd.f32 %v982, %v1227
        %v1229 = vpop.f32.mrb[0].mxu0
        %v1230 = vadd.f32 %v986, %v1229
        %1231 = vdwg.mxu0
        %1232 = vmatprep.subr.bf16.mxu0 %v1142
        %1233 = vmatpush1.bf16.msra.mxu0 %v1141
        %1234 = vmatprep.subr.bf16.mxu0 %v1144
        %1235 = vmatpush1.bf16.msra.mxu0 %v1143
        %1236 = vmatprep.subr.bf16.mxu0 %v1146
        %1237 = vmatpush1.bf16.msra.mxu0 %v1145
        %1238 = vmatprep.subr.bf16.mxu0 %v1148
        %1239 = vmatpush1.bf16.msra.mxu0 %v1147
        %1240 = vmatprep.subr.bf16.mxu0 0
        %1241 = vmatpush1.bf16.msra.mxu0 0
        %1242 = vmatprep.subr.bf16.mxu0 0
        %1243 = vmatpush1.bf16.msra.mxu0 0
        %1244 = vmatprep.subr.bf16.mxu0 0
        %1245 = vmatpush1.bf16.msra.mxu0 0
        %1246 = vmatprep.subr.bf16.mxu0 0
        %1247 = vmatpush1.bf16.msra.mxu0 0
        %1248 = vmatprep.subr.bf16.mxu0 0
        %1249 = vmatpush1.bf16.msra.mxu0 0
        %1250 = vmatprep.subr.bf16.mxu0 0
        %1251 = vmatpush1.bf16.msra.mxu0 0
        %1252 = vmatprep.subr.bf16.mxu0 0
        %1253 = vmatpush1.bf16.msra.mxu0 0
        %1254 = vmatprep.subr.bf16.mxu0 0
        %1255 = vmatpush1.bf16.msra.mxu0 0
        %1256 = vmatprep.subr.bf16.mxu0 0
        %1257 = vmatpush1.bf16.msra.mxu0 0
        %1258 = vmatprep.subr.bf16.mxu0 0
        %1259 = vmatpush1.bf16.msra.mxu0 0
        %1260 = vmatprep.subr.bf16.mxu0 0
        %1261 = vmatpush1.bf16.msra.mxu0 0
        %1262 = vmatprep.subr.bf16.mxu0 0
        %1263 = vmatpush1.bf16.msra.mxu0 0
        %1264 = vmatprep.mubr.bf16.mxu0 0
        %1265 = vmatmul.mubr.bf16.gmra.mrb[0].mxu0 %v451
        %v1266 = vpop.f32.mrb[0].mxu0
        %v1267 = vadd.f32 %v1224, %v1266
        %v1268 = vpop.f32.mrb[0].mxu0
        %v1269 = vadd.f32 %v1226, %v1268
        %v1270 = vpop.f32.mrb[0].mxu0
        %v1271 = vadd.f32 %v1228, %v1270
        %v1272 = vpop.f32.mrb[0].mxu0
        %v1273 = vadd.f32 %v1230, %v1272
        %1274 = vdwg.mxu0
        %v1275 = vmax.f32 %v1267, 0.0
        %v1276 = vmax.f32 %v1269, 0.0
        %v1277 = vmax.f32 %v1271, 0.0
        %v1278 = vmax.f32 %v1273, 0.0
        %v1279 = vadd.f32 %v1275, %v1277
        %v1280 = vrot.slane %v1279, 4
        %v1281 = vadd.f32 %v1279, %v1280
        %v1282 = vrot.slane %v1281, 2
        %v1283 = vadd.f32 %v1281, %v1282
        %v1284 = vrot.slane %v1283, 1
        %v1285 = vadd.f32 %v1283, %v1284
        %v1286 = vadd.f32 %v1276, %v1278
        %v1287 = vrot.slane %v1286, 4
        %v1288 = vadd.f32 %v1286, %v1287
        %v1289 = vrot.slane %v1288, 2
        %v1290 = vadd.f32 %v1288, %v1289
        %v1291 = vrot.slane %v1290, 1
        %v1292 = vadd.f32 %v1290, %v1291
        %v1293 = vpack.c.bf16 %v1285, %v1285
        %v1294 = vpack.c.bf16 %v1292, %v1292
        %v1295 = vld [vmem:[%s6] sm:$0xf]
        %v1296 = vld [vmem:[%s6 + $0x4] sm:$0xf]
        %v1297 = vld [vmem:[%s6 + $0x8] sm:$0xf]
        %v1298 = vld [vmem:[%s6 + $0xc] sm:$0xf]
        %v1299 = vld [vmem:[%s6 + $0x10] sm:$0xf]
        %v1300 = vld [vmem:[%s6 + $0x14] sm:$0xf]
        %v1301 = vld [vmem:[%s6 + $0x18] sm:$0xf]
        %v1302 = vld [vmem:[%s6 + $0x1c] sm:$0xf]
        %v1303 = vld [vmem:[%s6 + $0x20] sm:$0xf]
        %v1304 = vld [vmem:[%s6 + $0x24] sm:$0xf]
        %v1305 = vld [vmem:[%s6 + $0x28] sm:$0xf]
        %v1306 = vld [vmem:[%s6 + $0x2c] sm:$0xf]
        %v1307 = vld [vmem:[%s6 + $0x30] sm:$0xf]
        %v1308 = vld [vmem:[%s6 + $0x34] sm:$0xf]
        %v1309 = vld [vmem:[%s6 + $0x38] sm:$0xf]
        %v1310 = vld [vmem:[%s6 + $0x3c] sm:$0xf]
        %v1311 = vld [vmem:[%s6 + $0x40] sm:$0xf]
        %v1312 = vld [vmem:[%s6 + $0x44] sm:$0xf]
        %v1313 = vld [vmem:[%s6 + $0x48] sm:$0xf]
        %v1314 = vld [vmem:[%s6 + $0x4c] sm:$0xf]
        %v1315 = vld [vmem:[%s6 + $0x50] sm:$0xf]
        %v1316 = vld [vmem:[%s6 + $0x54] sm:$0xf]
        %v1317 = vld [vmem:[%s6 + $0x58] sm:$0xf]
        %v1318 = vld [vmem:[%s6 + $0x5c] sm:$0xf]
        %v1319 = vld [vmem:[%s6 + $0x60] sm:$0xf]
        %v1320 = vld [vmem:[%s6 + $0x64] sm:$0xf]
        %v1321 = vld [vmem:[%s6 + $0x68] sm:$0xf]
        %v1322 = vld [vmem:[%s6 + $0x6c] sm:$0xf]
        %v1323 = vld [vmem:[%s6 + $0x70] sm:$0xf]
        %v1324 = vld [vmem:[%s6 + $0x74] sm:$0xf]
        %v1325 = vld [vmem:[%s6 + $0x78] sm:$0xf]
        %v1326 = vld [vmem:[%s6 + $0x7c] sm:$0xf]
        %v1327 = vld [vmem:[%s7] sm:$0x1]
        %v1360 = vunpack.c.l.b16 %v1295
        %v1361 = vunpack.c.l.b16 %v1296
        %v1362 = vunpack.c.l.b16 %v1297
        %v1363 = vunpack.c.l.b16 %v1298
        %v1364 = vunpack.c.l.b16 %v1299
        %v1365 = vunpack.c.l.b16 %v1300
        %v1366 = vunpack.c.l.b16 %v1301
        %v1367 = vunpack.c.l.b16 %v1302
        %v1368 = vunpack.c.l.b16 %v1303
        %v1369 = vunpack.c.l.b16 %v1304
        %v1370 = vunpack.c.l.b16 %v1305
        %v1371 = vunpack.c.l.b16 %v1306
        %v1372 = vunpack.c.l.b16 %v1307
        %v1373 = vunpack.c.l.b16 %v1308
        %v1374 = vunpack.c.l.b16 %v1309
        %v1375 = vunpack.c.l.b16 %v1310
        %v1376 = vunpack.c.l.b16 %v1311
        %v1377 = vunpack.c.l.b16 %v1312
        %v1378 = vunpack.c.l.b16 %v1313
        %v1379 = vunpack.c.l.b16 %v1314
        %v1380 = vunpack.c.l.b16 %v1315
        %v1381 = vunpack.c.l.b16 %v1316
        %v1382 = vunpack.c.l.b16 %v1317
        %v1383 = vunpack.c.l.b16 %v1318
        %v1384 = vunpack.c.l.b16 %v1319
        %v1385 = vunpack.c.l.b16 %v1320
        %v1386 = vunpack.c.l.b16 %v1321
        %v1387 = vunpack.c.l.b16 %v1322
        %v1388 = vunpack.c.l.b16 %v1323
        %v1389 = vunpack.c.l.b16 %v1324
        %v1390 = vunpack.c.l.b16 %v1325
        %v1391 = vunpack.c.l.b16 %v1326
        %v1392 = vpack.c.b16 %v1361, %v1360
        %v1393 = vpack.c.b16 %v1363, %v1362
        %v1394 = vpack.c.b16 %v1365, %v1364
        %v1395 = vpack.c.b16 %v1367, %v1366
        %v1396 = vpack.c.b16 %v1369, %v1368
        %v1397 = vpack.c.b16 %v1371, %v1370
        %v1398 = vpack.c.b16 %v1373, %v1372
        %v1399 = vpack.c.b16 %v1375, %v1374
        %v1400 = vpack.c.b16 %v1377, %v1376
        %v1401 = vpack.c.b16 %v1379, %v1378
        %v1402 = vpack.c.b16 %v1381, %v1380
        %v1403 = vpack.c.b16 %v1383, %v1382
        %v1404 = vpack.c.b16 %v1385, %v1384
        %v1405 = vpack.c.b16 %v1387, %v1386
        %v1406 = vpack.c.b16 %v1389, %v1388
        %v1407 = vpack.c.b16 %v1391, %v1390
        %1424 = vmatprep.subr.bf16.mxu0 0
        %1425 = vmatpush1.bf16.msra.mxu0 %v1392
        %1426 = vmatprep.subr.bf16.mxu0 0
        %1427 = vmatpush1.bf16.msra.mxu0 %v1393
        %1428 = vmatprep.subr.bf16.mxu0 0
        %1429 = vmatpush1.bf16.msra.mxu0 %v1394
        %1430 = vmatprep.subr.bf16.mxu0 0
        %1431 = vmatpush1.bf16.msra.mxu0 %v1395
        %1432 = vmatprep.subr.bf16.mxu0 0
        %1433 = vmatpush1.bf16.msra.mxu0 %v1396
        %1434 = vmatprep.subr.bf16.mxu0 0
        %1435 = vmatpush1.bf16.msra.mxu0 %v1397
        %1436 = vmatprep.subr.bf16.mxu0 0
        %1437 = vmatpush1.bf16.msra.mxu0 %v1398
        %1438 = vmatprep.subr.bf16.mxu0 0
        %1439 = vmatpush1.bf16.msra.mxu0 %v1399
        %1440 = vmatprep.subr.bf16.mxu0 0
        %1441 = vmatpush1.bf16.msra.mxu0 %v1400
        %1442 = vmatprep.subr.bf16.mxu0 0
        %1443 = vmatpush1.bf16.msra.mxu0 %v1401
        %1444 = vmatprep.subr.bf16.mxu0 0
        %1445 = vmatpush1.bf16.msra.mxu0 %v1402
        %1446 = vmatprep.subr.bf16.mxu0 0
        %1447 = vmatpush1.bf16.msra.mxu0 %v1403
        %1448 = vmatprep.subr.bf16.mxu0 0
        %1449 = vmatpush1.bf16.msra.mxu0 %v1404
        %1450 = vmatprep.subr.bf16.mxu0 0
        %1451 = vmatpush1.bf16.msra.mxu0 %v1405
        %1452 = vmatprep.subr.bf16.mxu0 0
        %1453 = vmatpush1.bf16.msra.mxu0 %v1406
        %1454 = vmatprep.subr.bf16.mxu0 0
        %1455 = vmatpush1.bf16.msra.mxu0 %v1407
        %1456 = vmatprep.mubr.bf16.mxu0 %v1294
        %1457 = vmatmul.mubr.bf16.gmra.mrb[0].mxu0 %v1293
        %v1458 = vpop.f32.mrb[0].mxu0
        %v1459 = vadd.f32 %v1327, %v1458
        %v1460 = vpop.f32.mrb[0].mxu0
        %v1461 = vpop.f32.mrb[0].mxu0
        %v1462 = vpop.f32.mrb[0].mxu0
        %1463 = vdwg.mxu0
        %v1464 = vxor.u32 %v1459, 2147483648
        %v1465 = vmul.f32 %v1464, 1.442695
        %v1466 = vpow.pop %v1465
        %v1467 = vadd.f32 %v1466, 1.0
        %v1468 = vrcp.pop %v1467
        %v1469 = vmul.f32 1.0, %v1468
        %1471 = vrot.lane.b32.xlu0 %v1469, 16
        %v1472 = vpop.permute.xlu0 %1471
        %1474 = vrot.lane.b32.xlu0 %v1469, 32
        %v1475 = vpop.permute.xlu0 %1474
        %1477 = vrot.lane.b32.xlu0 %v1469, 48
        %v1478 = vpop.permute.xlu0 %1477
        %1480 = vrot.lane.b32.xlu0 %v1469, 64
        %v1481 = vpop.permute.xlu0 %1480
        %1483 = vrot.lane.b32.xlu0 %v1469, 80
        %v1484 = vpop.permute.xlu0 %1483
        %1486 = vrot.lane.b32.xlu0 %v1469, 96
        %v1487 = vpop.permute.xlu0 %1486
        %1489 = vrot.lane.b32.xlu0 %v1469, 112
        %v1490 = vpop.permute.xlu0 %1489
        %vm1492 = vcmask 130048
        %v1493 = vsel %vm1492, %v1469, %v1472
        %vm1494 = vcmask 261120
        %v1495 = vsel %vm1494, %v1493, %v1475
        %vm1496 = vcmask 392192
        %v1497 = vsel %vm1496, %v1495, %v1478
        %v1498 = vsel %vm382, %v1497, %v1481
        %vm1499 = vcmask 654336
        %v1500 = vsel %vm1499, %v1498, %v1484
        %vm1501 = vcmask 785408
        %v1502 = vsel %vm1501, %v1500, %v1487
        %vm1503 = vcmask 916480
        %v1504 = vsel %vm1503, %v1502, %v1490
        %v1505 = vlaneseq
        %v1506 = vshrl.u32 %v1505, 7
        %v1507 = vsub.s32 0, %v1506
        %v1508 = vrot.slane %v1504, %v1507
        %v1509 = vmul.f32 %v1275, %v1508
        %v1510 = vmul.f32 %v1276, %v1508
        %v1511 = vmul.f32 %v1277, %v1508
        %v1512 = vmul.f32 %v1278, %v1508
        %1513 = vst [vmem:[%s320] sm:$0xff] %v1509
        %1514 = vst [vmem:[%s320 + $0x8] sm:$0xff] %v1510
        %1515 = vst [vmem:[%s320 + $0x10] sm:$0xff] %v1511
        %1516 = vst [vmem:[%s320 + $0x18] sm:$0xff] %v1512
        %p1517 = scmp.lt.s32.totalorder %s20, 1
        %s1518 = scalar_select %p1517, %s20, 1
        %s1519 = smul.addr %s1518, 4
        %s1520 = smul.addr %s1519, 8
        %s1521 = scalar_lea.vmem %s8, %s1520
        // Predicated region
        $region57: #{hg_block_forward_nchw.1} parent=51 // pred_check
          %p1522 = pneg %p211
        $region58: #{hg_block_forward_nchw.1} parent=51 // pred_check_branch
          %1524 = sbr.rel (%p1522) target = $region60
        $region59: #{hg_block_forward_nchw.1} parent=51 // pred_region
          _
        $region60: #{hg_block_forward_nchw.1} parent=51 // pred_fallthru
          _
      $region52: #{hg_block_forward_nchw.1} parent=5 // pred_fallthru
        _
      %p1525 = scmp.le.s32.totalorder 2, %s15
      // Predicated region
      $region61: #{hg_block_forward_nchw.1} parent=5 // pred_check
        %p1526 = pneg %p1525
      $region62: #{hg_block_forward_nchw.1} parent=5 // pred_check_branch
        %1528 = sbr.rel (%p1526) target = $region64
      $region63: #{hg_block_forward_nchw.1} parent=5 // pred_region
        %s1529 = ssub.s32 %s15, 2
        // Predicated region
        $region65: #{hg_block_forward_nchw.1} parent=63 // pred_check
          %p1530 = pneg %p217
        $region66: #{hg_block_forward_nchw.1} parent=63 // pred_check_branch
          %1532 = sbr.rel (%p1530) target = $region68
        $region67: #{hg_block_forward_nchw.1} parent=63 // pred_region
          %p1533 = scmp.lt.s32.totalorder %s21, 1
          %s1534 = scalar_select %p1533, %s21, 1
          %s1535 = smul.addr %s1534, 4
          %s1536 = smul.addr %s1535, 8
          %s1537 = scalar_lea.vmem %s8, %s1536
        $region68: #{hg_block_forward_nchw.1} parent=63 // pred_fallthru
          _
      $region64: #{hg_block_forward_nchw.1} parent=5 // pred_fallthru
        _
    $region6: #{hg_block_forward_nchw.1} parent=1 // loop_footer
      %s19 = sadd.s32 1, %s15
    $region7: #{hg_block_forward_nchw.1} parent=1 // loop_footer_branch
      %14 = sbr.rel target = $region3
    $region8: #{hg_block_forward_nchw.1} parent=1 // loop_exit
      _
    %1538 = vsyncpa [#allocation3], 1
    %s1539 = scalar_lea.sflag [#allocation3], 1
    %1540 = vsyncpa %s1539, 1

</llo_original>
